<compile_context>
chip_gen: v7x
topology: tpu7x:2x2x1
jax: 0.10.0
libtpu: 0.0.40
codegen_flags: <defaults>
</compile_context>

<pallas_src>
import jax
import jax.numpy as jnp
from jax import lax
from jax.experimental import pallas as pl
from jax.experimental.pallas import tpu as pltpu


# ----------------------------------------------------------------------------
# Pallas kernel: stacked LSTM decoder + output Linear + log_softmax.
#   x_ref    : (T*BT, dim_word)  bf16, time-major rows [t0 b0..b7, t1 b0..b7, ...]
#   vid_ref  : (BT, dim_vid)     bf16, selected clip feature per (batch, topk) row
#   weights  : pre-transposed / g-columns pre-scaled by 2, bf16; biases f32
#   out_ref  : (T*BT, dw_pad)    f32 log-softmax logits (pad cols ~ -1e30)
#   h2_buf   : (T*BT, H)         f32 VMEM scratch collecting per-step h2
# PyTorch nn.LSTM gate ordering (i, f, g, o) is preserved.
# ----------------------------------------------------------------------------
def _rnn_decode_kernel(x_ref, vid_ref,
                       wih1_ref, whh1_ref, b1_ref,
                       wih2v_ref, w2rh1_ref, w2rh2_ref, b2_ref,
                       wout_ref, bout_ref,
                       out_ref, h2_buf):
    TB = x_ref.shape[0]
    BT = vid_ref.shape[0]
    T = TB // BT
    H = whh1_ref.shape[0]
    f32 = jnp.float32
    bf16 = jnp.bfloat16

    # ---- hoisted, time-invariant work ---------------------------------------
    # rnn1 input projection for all timesteps at once, bias folded in.
    xw = jnp.dot(x_ref[...], wih1_ref[...], preferred_element_type=f32) + b1_ref[...]
    # rnn2: video-feature contribution is constant over time; fold its bias too.
    vid_gate = jnp.dot(vid_ref[...], wih2v_ref[...],
                       preferred_element_type=f32) + b2_ref[...]
    # Lane mask selecting the 'g' (cell candidate) columns; gate nonlinearity
    # runs on the full (BT, 4H) = one f32 vreg.
    lane = lax.broadcasted_iota(jnp.int32, (BT, 4 * H), 1)
    is_g = (lane >= 2 * H) & (lane < 3 * H)

    def lstm_update(gates, c_prev):
        # g columns were pre-scaled by 2 in init_params so a single sigmoid
        # gives all four activations: tanh(x) = 2*sigmoid(2x) - 1.
        s = jax.nn.sigmoid(gates)
        act = jnp.where(is_g, 2.0 * s - 1.0, s)
        i = act[:, 0 * H:1 * H]
        f = act[:, 1 * H:2 * H]
        g = act[:, 2 * H:3 * H]
        o = act[:, 3 * H:4 * H]
        c_new = f * c_prev + i * g
        h_new = o * jnp.tanh(c_new)
        return h_new, c_new

    h1 = jnp.zeros((BT, H), f32)
    c1 = jnp.zeros((BT, H), f32)
    h2 = jnp.zeros((BT, H), f32)
    c2 = jnp.zeros((BT, H), f32)

    # ---- recurrence: fully unrolled (T is static & tiny), state in vregs -----
    for t in range(T):
        # rnn1: only the recurrent matmul remains inside the loop.
        g1 = xw[t * BT:(t + 1) * BT, :] + jnp.dot(
            h1.astype(bf16), whh1_ref[...], preferred_element_type=f32)
        h1, c1 = lstm_update(g1, c1)

        # rnn2: two K=H recurrent dots (no per-step lane concat), f32 accum.
        g2 = (vid_gate
              + jnp.dot(h1.astype(bf16), w2rh1_ref[...], preferred_element_type=f32)
              + jnp.dot(h2.astype(bf16), w2rh2_ref[...], preferred_element_type=f32))
        h2, c2 = lstm_update(g2, c2)

        # Aligned 8-row store into VMEM scratch; hides under later-step work.
        h2_buf[t * BT:(t + 1) * BT, :] = h2

    # ---- output projection + log_softmax, batched over all timesteps ---------
    logits = jnp.dot(h2_buf[...].astype(bf16), wout_ref[...],
                     preferred_element_type=f32) + bout_ref[...]
    m = jnp.max(logits, axis=-1, keepdims=True)
    z = logits - m
    lse = jnp.log(jnp.sum(jnp.exp(z), axis=-1, keepdims=True))
    out_ref[...] = z - lse                      # single lane-dense store


def rnn_decode_pallas(x_flat, input_vid, p):
    TB = x_flat.shape[0]
    H = p["dim_hidden"]
    dw_pad = p["wout_t"].shape[1]
    args = (x_flat, input_vid,
            p["wih1_t"], p["whh1_t"], p["b1"],
            p["wih2v_t"], p["w2rh1_t"], p["w2rh2_t"], p["b2"],
            p["wout_t"], p["bout"])

    def full(a):
        return pl.BlockSpec(a.shape, lambda i, _n=a.ndim: (0,) * _n)

    logp_pad = pl.pallas_call(
        _rnn_decode_kernel,
        out_shape=jax.ShapeDtypeStruct((TB, dw_pad), jnp.float32),
        grid=(1,),
        in_specs=[full(a) for a in args],
        out_specs=pl.BlockSpec((TB, dw_pad), lambda i: (0, 0)),
        scratch_shapes=[pltpu.VMEM((TB, H), jnp.float32)],
        compiler_params=pltpu.CompilerParams(dimension_semantics=("arbitrary",)),
    )(*args)
    # Drop the lane padding (pad columns are ~ -1e30 after log_softmax).
    return logp_pad[:, :p["dim_word"]]


# ----------------------------------------------------------------------------
# Parameter init (deterministic, PyTorch-style uniform(-1/sqrt(H), 1/sqrt(H))).
# Kernel weights are pre-transposed (x @ W layout), rnn2's recurrent weights
# are split (h1 part / h2 part), biases are pre-summed (b_ih+b_hh), the g-gate
# columns are pre-scaled by 2 (sigmoid identity), and the output layer is
# padded to 128 lanes. Raw f32 weights are kept for the pure-JAX reference.
# ----------------------------------------------------------------------------
def init_params(key, dim_word, dim_hidden, dim_vid, topk):
    H = dim_hidden
    ks = jax.random.split(key, 10)
    s = 1.0 / float(H) ** 0.5
    u = lambda k, shape: jax.random.uniform(k, shape, jnp.float32, -s, s)

    w_ih1 = u(ks[0], (4 * H, dim_word))
    w_hh1 = u(ks[1], (4 * H, H))
    b1 = u(ks[2], (4 * H,)) + u(ks[3], (4 * H,))          # b_ih1 + b_hh1
    w_ih2 = u(ks[4], (4 * H, dim_vid + H))                 # cat(input_vid, output1)
    w_hh2 = u(ks[5], (4 * H, H))
    b2 = u(ks[6], (4 * H,)) + u(ks[7], (4 * H,))           # b_ih2 + b_hh2
    w_out = u(ks[8], (dim_word, H))
    b_out = u(ks[9], (dim_word,))

    # Scale ONLY the g-gate rows [2H, 3H) by 2 (exact in bf16): tanh(x)=2*sig(2x)-1.
    gscale = jnp.ones((4 * H, 1), jnp.float32).at[2 * H:3 * H].set(2.0)
    gscale_b = gscale[:, 0]

    # Lane-dense output layer: pad to a multiple of 128 lanes, bias pad = -1e30.
    dw_pad = ((dim_word + 127) // 128) * 128
    w_out_p = jnp.zeros((dw_pad, H), jnp.float32).at[:dim_word].set(w_out)
    b_out_p = jnp.full((dw_pad,), -1e30, jnp.float32).at[:dim_word].set(b_out)

    bf16 = jnp.bfloat16
    return dict(
        topk=topk, dim_hidden=H, dim_word=dim_word,
        wih1_t=(gscale * w_ih1).T.astype(bf16),            # (dim_word, 4H)
        whh1_t=(gscale * w_hh1).T.astype(bf16),             # (H, 4H)
        b1=(gscale_b * b1)[None, :],                        # (1, 4H) f32
        wih2v_t=(gscale * w_ih2[:, :dim_vid]).T.astype(bf16),   # (dim_vid, 4H)
        w2rh1_t=(gscale * w_ih2[:, dim_vid:]).T.astype(bf16),   # (H, 4H)
        w2rh2_t=(gscale * w_hh2).T.astype(bf16),                # (H, 4H)
        b2=(gscale_b * b2)[None, :],                        # (1, 4H) f32
        wout_t=w_out_p.T.astype(bf16),                      # (H, dw_pad)
        bout=b_out_p[None, :],                              # (1, dw_pad) f32
        raw=dict(w_ih1=w_ih1, w_hh1=w_hh1, b1=b1[None, :],
                 w_ih2=w_ih2, w_hh2=w_hh2, b2=b2[None, :],
                 w_out=w_out, b_out=b_out[None, :]),
    )


# ----------------------------------------------------------------------------
# Shared pre-processing glue (plain JAX; XLA fuses the tiny elementwise ops
# with top_k / gather) and the forward pass.
# ----------------------------------------------------------------------------
def _prepare_inputs(params, vid_feats, map_mask, prediction, masks,
                    target_variable, target_variable_mask):
    B, dim_vid, N_map, _ = vid_feats.shape
    _, n_words, dim_word = target_variable.shape
    topk = params["topk"]

    # joint_prob = sigmoid(prediction) * masks, then topk over flattened map.
    jp = (jax.nn.sigmoid(prediction) * masks).reshape(B, N_map * N_map)
    _, indices = jax.lax.top_k(jp, topk)                             # (B, topk)

    # gather selected clip features: (map_mask * vid_feats)[b, :, idx]
    masked_vid = (map_mask * vid_feats).reshape(B, dim_vid, N_map * N_map)
    gathered = jnp.take_along_axis(masked_vid, indices[:, None, :], axis=2)
    input_vid = jnp.transpose(gathered, (0, 2, 1)).reshape(B * topk, dim_vid)

    # masked word embeddings, replicated per proposal.
    tv = target_variable_mask * target_variable                      # (B, n_words, dim_word)
    target_var = jnp.broadcast_to(
        tv[:, None], (B, topk, n_words, dim_word)).reshape(B * topk, n_words, dim_word)

    T, BT = n_words - 1, B * topk
    # time-major decoder input (drop last word), flattened to (T*BT, dim_word).
    x_flat = (jnp.transpose(target_var[:, :-1, :], (1, 0, 2))
              .reshape(T * BT, dim_word).astype(jnp.bfloat16))
    return (x_flat, input_vid.astype(jnp.bfloat16), target_var, indices,
            (B, topk, T, BT, dim_word))


def my_caption_forward(params, vid_feats, map_mask, prediction, masks,
                       target_variable, target_variable_mask):
    x_flat, vid_bf, target_var, indices, (B, topk, T, BT, dw) = _prepare_inputs(
        params, vid_feats, map_mask, prediction, masks,
        target_variable, target_variable_mask)

    logp = rnn_decode_pallas(x_flat, vid_bf, params)                 # (T*BT, dw)
    out_caption = jnp.transpose(logp.reshape(T, BT, dw), (1, 0, 2)
                                ).reshape(B, topk, T, dw)
    return out_caption, target_var, indices[:, None, :]              # indices: (B, 1, topk)


# ----------------------------------------------------------------------------
# Pure-JAX reference of the decoder using the RAW (unscaled, unfused) weights
# and the standard LSTM formulation, for a correctness check in __main__.
# ----------------------------------------------------------------------------
def _decode_reference(x_flat, input_vid, p, T, BT):
    r = p["raw"]
    H = p["dim_hidden"]
    f32, bf16 = jnp.float32, jnp.bfloat16
    dot = lambda a, b: jnp.dot(a.astype(bf16), b.astype(bf16),
                               preferred_element_type=f32)

    def lstm(gates, c):
        i = jax.nn.sigmoid(gates[:, :H])
        f = jax.nn.sigmoid(gates[:, H:2 * H])
        g = jnp.tanh(gates[:, 2 * H:3 * H])
        o = jax.nn.sigmoid(gates[:, 3 * H:])
        c_new = f * c + i * g
        return o * jnp.tanh(c_new), c_new

    xw = dot(x_flat, r["w_ih1"].T) + r["b1"]
    h1 = c1 = h2 = c2 = jnp.zeros((BT, H), f32)
    hs = []
    for t in range(T):
        g1 = xw[t * BT:(t + 1) * BT] + dot(h1, r["w_hh1"].T)
        h1, c1 = lstm(g1, c1)
        inp2 = jnp.concatenate([input_vid.astype(f32), h1], axis=-1)
        g2 = dot(inp2, r["w_ih2"].T) + dot(h2, r["w_hh2"].T) + r["b2"]
        h2, c2 = lstm(g2, c2)
        hs.append(h2)
    logits = dot(jnp.concatenate(hs, axis=0), r["w_out"].T) + r["b_out"]
    return jax.nn.log_softmax(logits, axis=-1)                       # (T*BT, dw)


def reference_forward(params, vid_feats, map_mask, prediction, masks,
                      target_variable, target_variable_mask):
    x_flat, vid_bf, target_var, indices, (B, topk, T, BT, dw) = _prepare_inputs(
        params, vid_feats, map_mask, prediction, masks,
        target_variable, target_variable_mask)
    logp = _decode_reference(x_flat, vid_bf, params, T, BT)
    out_caption = jnp.transpose(logp.reshape(T, BT, dw), (1, 0, 2)
                                ).reshape(B, topk, T, dw)
    return out_caption, target_var, indices[:, None, :]


if __name__ == "__main__":
    # cfg: RNN_CELL='lstm', N_LAYERS=1, DIM_HIDDEN=32, DIM_WORD=16, DIM_VID=8, TOPK=4
    B, dim_vid, N_map = 2, 8, 4
    n_words, dim_word, dim_hidden, topk = 6, 16, 32, 4

    key = jax.random.PRNGKey(0)
    k = jax.random.split(key, 7)
    vid_feats = jax.random.normal(k[0], (B, dim_vid, N_map, N_map), jnp.float32)
    map_mask = (jax.random.uniform(k[1], (B, 1, N_map, N_map)) > 0.3).astype(jnp.float32)
    prediction = jax.random.normal(k[2], (B, 1, N_map, N_map), jnp.float32)
    masks = (jax.random.uniform(k[3], (B, 1, N_map, N_map)) > 0.2).astype(jnp.float32)
    target_variable = jax.random.normal(k[4], (B, n_words, dim_word), jnp.float32)
    target_variable_mask = (jax.random.uniform(k[5], (B, n_words, 1)) > 0.1).astype(jnp.float32)

    params = init_params(k[6], dim_word, dim_hidden, dim_vid, topk)

    out_caption, target_var, indices = my_caption_forward(
        params, vid_feats, map_mask, prediction, masks,
        target_variable, target_variable_mask)
    jax.block_until_ready((out_caption, target_var, indices))

    ref_caption, _, _ = reference_forward(
        params, vid_feats, map_mask, prediction, masks,
        target_variable, target_variable_mask)

    assert out_caption.shape == (B, topk, n_words - 1, dim_word)
    assert target_var.shape == (B * topk, n_words, dim_word)
    assert indices.shape == (B, 1, topk)
    assert bool(jnp.all(jnp.isfinite(out_caption)))
    assert bool(jnp.allclose(out_caption, ref_caption, atol=5e-2, rtol=5e-2))
    print("KERNEL_OK")
</pallas_src>

<mosaic_0001>
module attributes {stable_mosaic.version = 11 : i64} {
  func.func @_rnn_decode_kernel(%arg0: i32, %arg1: memref<40x16xbf16, #tpu.memory_space<vmem>>, %arg2: memref<8x8xbf16, #tpu.memory_space<vmem>>, %arg3: memref<16x128xbf16, #tpu.memory_space<vmem>>, %arg4: memref<32x128xbf16, #tpu.memory_space<vmem>>, %arg5: memref<1x128xf32, #tpu.memory_space<vmem>>, %arg6: memref<8x128xbf16, #tpu.memory_space<vmem>>, %arg7: memref<32x128xbf16, #tpu.memory_space<vmem>>, %arg8: memref<32x128xbf16, #tpu.memory_space<vmem>>, %arg9: memref<1x128xf32, #tpu.memory_space<vmem>>, %arg10: memref<32x128xbf16, #tpu.memory_space<vmem>>, %arg11: memref<1x128xf32, #tpu.memory_space<vmem>>, %arg12: memref<40x128xf32, #tpu.memory_space<vmem>>, %arg13: memref<40x32xf32, #tpu.memory_space<vmem>>) attributes {dimension_semantics = [#tpu.dimension_semantics<arbitrary>], iteration_bounds = array<i64: 1>, scalar_prefetch = 0 : i64, scratch_operands = 1 : i64, tpu.core_type = #tpu.core_type<tc>, window_params = [{pipeline_mode = #tpu.pipeline_mode<synchronous>, transform_indices = @transform_0, window_bounds = array<i64: 40, 16>}, {pipeline_mode = #tpu.pipeline_mode<synchronous>, transform_indices = @transform_1, window_bounds = array<i64: 8, 8>}, {pipeline_mode = #tpu.pipeline_mode<synchronous>, transform_indices = @transform_2, window_bounds = array<i64: 16, 128>}, {pipeline_mode = #tpu.pipeline_mode<synchronous>, transform_indices = @transform_3, window_bounds = array<i64: 32, 128>}, {pipeline_mode = #tpu.pipeline_mode<synchronous>, transform_indices = @transform_4, window_bounds = array<i64: 1, 128>}, {pipeline_mode = #tpu.pipeline_mode<synchronous>, transform_indices = @transform_5, window_bounds = array<i64: 8, 128>}, {pipeline_mode = #tpu.pipeline_mode<synchronous>, transform_indices = @transform_6, window_bounds = array<i64: 32, 128>}, {pipeline_mode = #tpu.pipeline_mode<synchronous>, transform_indices = @transform_7, window_bounds = array<i64: 32, 128>}, {pipeline_mode = #tpu.pipeline_mode<synchronous>, transform_indices = @transform_8, window_bounds = array<i64: 1, 128>}, {pipeline_mode = #tpu.pipeline_mode<synchronous>, transform_indices = @transform_9, window_bounds = array<i64: 32, 128>}, {pipeline_mode = #tpu.pipeline_mode<synchronous>, transform_indices = @transform_10, window_bounds = array<i64: 1, 128>}, {pipeline_mode = #tpu.pipeline_mode<synchronous>, transform_indices = @transform_11, window_bounds = array<i64: 40, 128>}]} {
    %c0 = arith.constant 0 : index
    %c0_0 = arith.constant 0 : index
    %0 = vector.load %arg1[%c0, %c0_0] : memref<40x16xbf16, #tpu.memory_space<vmem>>, vector<40x16xbf16>
    %c0_1 = arith.constant 0 : index
    %c0_2 = arith.constant 0 : index
    %1 = vector.load %arg3[%c0_1, %c0_2] : memref<16x128xbf16, #tpu.memory_space<vmem>>, vector<16x128xbf16>
    %cst = arith.constant dense<0.000000e+00> : vector<40x128xf32>
    %2 = tpu.matmul %0, %1, %cst {dimension_numbers = #tpu.dot_dimension_numbers<[1], [0], [0], [1], [0, 0, 1, 1], [], []>} : vector<40x16xbf16>, vector<16x128xbf16>, vector<40x128xf32> -> vector<40x128xf32>
    %c0_3 = arith.constant 0 : index
    %c0_4 = arith.constant 0 : index
    %3 = vector.load %arg5[%c0_3, %c0_4] : memref<1x128xf32, #tpu.memory_space<vmem>>, vector<1x128xf32>
    %4 = vector.broadcast %3 : vector<1x128xf32> to vector<40x128xf32>
    %5 = arith.addf %2, %4 : vector<40x128xf32>
    %c0_5 = arith.constant 0 : index
    %c0_6 = arith.constant 0 : index
    %6 = vector.load %arg2[%c0_5, %c0_6] : memref<8x8xbf16, #tpu.memory_space<vmem>>, vector<8x8xbf16>
    %c0_7 = arith.constant 0 : index
    %c0_8 = arith.constant 0 : index
    %7 = vector.load %arg6[%c0_7, %c0_8] : memref<8x128xbf16, #tpu.memory_space<vmem>>, vector<8x128xbf16>
    %cst_9 = arith.constant dense<0.000000e+00> : vector<8x128xf32>
    %8 = tpu.matmul %6, %7, %cst_9 {dimension_numbers = #tpu.dot_dimension_numbers<[1], [0], [0], [1], [0, 0, 1, 1], [], []>} : vector<8x8xbf16>, vector<8x128xbf16>, vector<8x128xf32> -> vector<8x128xf32>
    %c0_10 = arith.constant 0 : index
    %c0_11 = arith.constant 0 : index
    %9 = vector.load %arg9[%c0_10, %c0_11] : memref<1x128xf32, #tpu.memory_space<vmem>>, vector<1x128xf32>
    %10 = vector.broadcast %9 : vector<1x128xf32> to vector<8x128xf32>
    %11 = arith.addf %8, %10 : vector<8x128xf32>
    %12 = tpu.iota {dimensions = array<i32: 1>} : vector<8x128xi32>
    %c64_i32 = arith.constant 64 : i32
    %13 = vector.broadcast %c64_i32 : i32 to vector<8x128xi32>
    %14 = arith.cmpi sge, %12, %13 : vector<8x128xi32>
    %c96_i32 = arith.constant 96 : i32
    %15 = vector.broadcast %c96_i32 : i32 to vector<8x128xi32>
    %16 = arith.cmpi slt, %12, %15 : vector<8x128xi32>
    %17 = arith.andi %14, %16 : vector<8x128xi1>
    %cst_12 = arith.constant 0.000000e+00 : f32
    %18 = vector.broadcast %cst_12 : f32 to vector<8x32xf32>
    %cst_13 = arith.constant 0.000000e+00 : f32
    %19 = vector.broadcast %cst_13 : f32 to vector<8x32xf32>
    %cst_14 = arith.constant 0.000000e+00 : f32
    %20 = vector.broadcast %cst_14 : f32 to vector<8x32xf32>
    %cst_15 = arith.constant 0.000000e+00 : f32
    %21 = vector.broadcast %cst_15 : f32 to vector<8x32xf32>
    %22 = vector.extract_strided_slice %5 {offsets = [0, 0], sizes = [8, 128], strides = [1, 1]} : vector<40x128xf32> to vector<8x128xf32>
    %23 = arith.truncf %18 : vector<8x32xf32> to vector<8x32xbf16>
    %c0_16 = arith.constant 0 : index
    %c0_17 = arith.constant 0 : index
    %24 = vector.load %arg4[%c0_16, %c0_17] : memref<32x128xbf16, #tpu.memory_space<vmem>>, vector<32x128xbf16>
    %cst_18 = arith.constant dense<0.000000e+00> : vector<8x128xf32>
    %25 = tpu.matmul %23, %24, %cst_18 {dimension_numbers = #tpu.dot_dimension_numbers<[1], [0], [0], [1], [0, 0, 1, 1], [], []>} : vector<8x32xbf16>, vector<32x128xbf16>, vector<8x128xf32> -> vector<8x128xf32>
    %26 = arith.addf %22, %25 : vector<8x128xf32>
    %27 = arith.negf %26 : vector<8x128xf32>
    %28 = math.exp %27 : vector<8x128xf32>
    %cst_19 = arith.constant 1.000000e+00 : f32
    %29 = vector.broadcast %cst_19 : f32 to vector<8x128xf32>
    %30 = arith.addf %29, %28 : vector<8x128xf32>
    %31 = arith.divf %29, %30 : vector<8x128xf32>
    %cst_20 = arith.constant 2.000000e+00 : f32
    %32 = vector.broadcast %cst_20 : f32 to vector<8x128xf32>
    %33 = arith.mulf %32, %31 : vector<8x128xf32>
    %cst_21 = arith.constant 1.000000e+00 : f32
    %34 = vector.broadcast %cst_21 : f32 to vector<8x128xf32>
    %35 = arith.subf %33, %34 : vector<8x128xf32>
    %36 = arith.select %17, %35, %31 : vector<8x128xi1>, vector<8x128xf32>
    %37 = vector.extract_strided_slice %36 {offsets = [0, 0], sizes = [8, 32], strides = [1, 1]} : vector<8x128xf32> to vector<8x32xf32>
    %38 = vector.extract_strided_slice %36 {offsets = [0, 32], sizes = [8, 32], strides = [1, 1]} : vector<8x128xf32> to vector<8x32xf32>
    %39 = vector.extract_strided_slice %36 {offsets = [0, 64], sizes = [8, 32], strides = [1, 1]} : vector<8x128xf32> to vector<8x32xf32>
    %40 = vector.extract_strided_slice %36 {offsets = [0, 96], sizes = [8, 32], strides = [1, 1]} : vector<8x128xf32> to vector<8x32xf32>
    %41 = arith.mulf %38, %19 : vector<8x32xf32>
    %42 = arith.mulf %37, %39 : vector<8x32xf32>
    %43 = arith.addf %41, %42 : vector<8x32xf32>
    %44 = math.tanh %43 : vector<8x32xf32>
    %45 = arith.mulf %40, %44 : vector<8x32xf32>
    %46 = arith.truncf %45 : vector<8x32xf32> to vector<8x32xbf16>
    %c0_22 = arith.constant 0 : index
    %c0_23 = arith.constant 0 : index
    %47 = vector.load %arg7[%c0_22, %c0_23] : memref<32x128xbf16, #tpu.memory_space<vmem>>, vector<32x128xbf16>
    %cst_24 = arith.constant dense<0.000000e+00> : vector<8x128xf32>
    %48 = tpu.matmul %46, %47, %cst_24 {dimension_numbers = #tpu.dot_dimension_numbers<[1], [0], [0], [1], [0, 0, 1, 1], [], []>} : vector<8x32xbf16>, vector<32x128xbf16>, vector<8x128xf32> -> vector<8x128xf32>
    %49 = arith.addf %11, %48 : vector<8x128xf32>
    %50 = arith.truncf %20 : vector<8x32xf32> to vector<8x32xbf16>
    %c0_25 = arith.constant 0 : index
    %c0_26 = arith.constant 0 : index
    %51 = vector.load %arg8[%c0_25, %c0_26] : memref<32x128xbf16, #tpu.memory_space<vmem>>, vector<32x128xbf16>
    %cst_27 = arith.constant dense<0.000000e+00> : vector<8x128xf32>
    %52 = tpu.matmul %50, %51, %cst_27 {dimension_numbers = #tpu.dot_dimension_numbers<[1], [0], [0], [1], [0, 0, 1, 1], [], []>} : vector<8x32xbf16>, vector<32x128xbf16>, vector<8x128xf32> -> vector<8x128xf32>
    %53 = arith.addf %49, %52 : vector<8x128xf32>
    %54 = arith.negf %53 : vector<8x128xf32>
    %55 = math.exp %54 : vector<8x128xf32>
    %cst_28 = arith.constant 1.000000e+00 : f32
    %56 = vector.broadcast %cst_28 : f32 to vector<8x128xf32>
    %57 = arith.addf %56, %55 : vector<8x128xf32>
    %58 = arith.divf %56, %57 : vector<8x128xf32>
    %cst_29 = arith.constant 2.000000e+00 : f32
    %59 = vector.broadcast %cst_29 : f32 to vector<8x128xf32>
    %60 = arith.mulf %59, %58 : vector<8x128xf32>
    %cst_30 = arith.constant 1.000000e+00 : f32
    %61 = vector.broadcast %cst_30 : f32 to vector<8x128xf32>
    %62 = arith.subf %60, %61 : vector<8x128xf32>
    %63 = arith.select %17, %62, %58 : vector<8x128xi1>, vector<8x128xf32>
    %64 = vector.extract_strided_slice %63 {offsets = [0, 0], sizes = [8, 32], strides = [1, 1]} : vector<8x128xf32> to vector<8x32xf32>
    %65 = vector.extract_strided_slice %63 {offsets = [0, 32], sizes = [8, 32], strides = [1, 1]} : vector<8x128xf32> to vector<8x32xf32>
    %66 = vector.extract_strided_slice %63 {offsets = [0, 64], sizes = [8, 32], strides = [1, 1]} : vector<8x128xf32> to vector<8x32xf32>
    %67 = vector.extract_strided_slice %63 {offsets = [0, 96], sizes = [8, 32], strides = [1, 1]} : vector<8x128xf32> to vector<8x32xf32>
    %68 = arith.mulf %65, %21 : vector<8x32xf32>
    %69 = arith.mulf %64, %66 : vector<8x32xf32>
    %70 = arith.addf %68, %69 : vector<8x32xf32>
    %71 = math.tanh %70 : vector<8x32xf32>
    %72 = arith.mulf %67, %71 : vector<8x32xf32>
    %c0_31 = arith.constant 0 : index
    %c0_32 = arith.constant 0 : index
    %73 = vector.load %arg13[%c0_31, %c0_32] : memref<40x32xf32, #tpu.memory_space<vmem>>, vector<8x32xf32>
    tpu.vector_store %arg13[%c0_31, %c0_32], %72 {strides = array<i32>} : memref<40x32xf32, #tpu.memory_space<vmem>>, vector<8x32xf32>,
    %74 = vector.extract_strided_slice %5 {offsets = [8, 0], sizes = [8, 128], strides = [1, 1]} : vector<40x128xf32> to vector<8x128xf32>
    %75 = arith.truncf %45 : vector<8x32xf32> to vector<8x32xbf16>
    %c0_33 = arith.constant 0 : index
    %c0_34 = arith.constant 0 : index
    %76 = vector.load %arg4[%c0_33, %c0_34] : memref<32x128xbf16, #tpu.memory_space<vmem>>, vector<32x128xbf16>
    %cst_35 = arith.constant dense<0.000000e+00> : vector<8x128xf32>
    %77 = tpu.matmul %75, %76, %cst_35 {dimension_numbers = #tpu.dot_dimension_numbers<[1], [0], [0], [1], [0, 0, 1, 1], [], []>} : vector<8x32xbf16>, vector<32x128xbf16>, vector<8x128xf32> -> vector<8x128xf32>
    %78 = arith.addf %74, %77 : vector<8x128xf32>
    %79 = arith.negf %78 : vector<8x128xf32>
    %80 = math.exp %79 : vector<8x128xf32>
    %cst_36 = arith.constant 1.000000e+00 : f32
    %81 = vector.broadcast %cst_36 : f32 to vector<8x128xf32>
    %82 = arith.addf %81, %80 : vector<8x128xf32>
    %83 = arith.divf %81, %82 : vector<8x128xf32>
    %cst_37 = arith.constant 2.000000e+00 : f32
    %84 = vector.broadcast %cst_37 : f32 to vector<8x128xf32>
    %85 = arith.mulf %84, %83 : vector<8x128xf32>
    %cst_38 = arith.constant 1.000000e+00 : f32
    %86 = vector.broadcast %cst_38 : f32 to vector<8x128xf32>
    %87 = arith.subf %85, %86 : vector<8x128xf32>
    %88 = arith.select %17, %87, %83 : vector<8x128xi1>, vector<8x128xf32>
    %89 = vector.extract_strided_slice %88 {offsets = [0, 0], sizes = [8, 32], strides = [1, 1]} : vector<8x128xf32> to vector<8x32xf32>
    %90 = vector.extract_strided_slice %88 {offsets = [0, 32], sizes = [8, 32], strides = [1, 1]} : vector<8x128xf32> to vector<8x32xf32>
    %91 = vector.extract_strided_slice %88 {offsets = [0, 64], sizes = [8, 32], strides = [1, 1]} : vector<8x128xf32> to vector<8x32xf32>
    %92 = vector.extract_strided_slice %88 {offsets = [0, 96], sizes = [8, 32], strides = [1, 1]} : vector<8x128xf32> to vector<8x32xf32>
    %93 = arith.mulf %90, %43 : vector<8x32xf32>
    %94 = arith.mulf %89, %91 : vector<8x32xf32>
    %95 = arith.addf %93, %94 : vector<8x32xf32>
    %96 = math.tanh %95 : vector<8x32xf32>
    %97 = arith.mulf %92, %96 : vector<8x32xf32>
    %98 = arith.truncf %97 : vector<8x32xf32> to vector<8x32xbf16>
    %c0_39 = arith.constant 0 : index
    %c0_40 = arith.constant 0 : index
    %99 = vector.load %arg7[%c0_39, %c0_40] : memref<32x128xbf16, #tpu.memory_space<vmem>>, vector<32x128xbf16>
    %cst_41 = arith.constant dense<0.000000e+00> : vector<8x128xf32>
    %100 = tpu.matmul %98, %99, %cst_41 {dimension_numbers = #tpu.dot_dimension_numbers<[1], [0], [0], [1], [0, 0, 1, 1], [], []>} : vector<8x32xbf16>, vector<32x128xbf16>, vector<8x128xf32> -> vector<8x128xf32>
    %101 = arith.addf %11, %100 : vector<8x128xf32>
    %102 = arith.truncf %72 : vector<8x32xf32> to vector<8x32xbf16>
    %c0_42 = arith.constant 0 : index
    %c0_43 = arith.constant 0 : index
    %103 = vector.load %arg8[%c0_42, %c0_43] : memref<32x128xbf16, #tpu.memory_space<vmem>>, vector<32x128xbf16>
    %cst_44 = arith.constant dense<0.000000e+00> : vector<8x128xf32>
    %104 = tpu.matmul %102, %103, %cst_44 {dimension_numbers = #tpu.dot_dimension_numbers<[1], [0], [0], [1], [0, 0, 1, 1], [], []>} : vector<8x32xbf16>, vector<32x128xbf16>, vector<8x128xf32> -> vector<8x128xf32>
    %105 = arith.addf %101, %104 : vector<8x128xf32>
    %106 = arith.negf %105 : vector<8x128xf32>
    %107 = math.exp %106 : vector<8x128xf32>
    %cst_45 = arith.constant 1.000000e+00 : f32
    %108 = vector.broadcast %cst_45 : f32 to vector<8x128xf32>
    %109 = arith.addf %108, %107 : vector<8x128xf32>
    %110 = arith.divf %108, %109 : vector<8x128xf32>
    %cst_46 = arith.constant 2.000000e+00 : f32
    %111 = vector.broadcast %cst_46 : f32 to vector<8x128xf32>
    %112 = arith.mulf %111, %110 : vector<8x128xf32>
    %cst_47 = arith.constant 1.000000e+00 : f32
    %113 = vector.broadcast %cst_47 : f32 to vector<8x128xf32>
    %114 = arith.subf %112, %113 : vector<8x128xf32>
    %115 = arith.select %17, %114, %110 : vector<8x128xi1>, vector<8x128xf32>
    %116 = vector.extract_strided_slice %115 {offsets = [0, 0], sizes = [8, 32], strides = [1, 1]} : vector<8x128xf32> to vector<8x32xf32>
    %117 = vector.extract_strided_slice %115 {offsets = [0, 32], sizes = [8, 32], strides = [1, 1]} : vector<8x128xf32> to vector<8x32xf32>
    %118 = vector.extract_strided_slice %115 {offsets = [0, 64], sizes = [8, 32], strides = [1, 1]} : vector<8x128xf32> to vector<8x32xf32>
    %119 = vector.extract_strided_slice %115 {offsets = [0, 96], sizes = [8, 32], strides = [1, 1]} : vector<8x128xf32> to vector<8x32xf32>
    %120 = arith.mulf %117, %70 : vector<8x32xf32>
    %121 = arith.mulf %116, %118 : vector<8x32xf32>
    %122 = arith.addf %120, %121 : vector<8x32xf32>
    %123 = math.tanh %122 : vector<8x32xf32>
    %124 = arith.mulf %119, %123 : vector<8x32xf32>
    %c8 = arith.constant 8 : index
    %c0_48 = arith.constant 0 : index
    %125 = vector.load %arg13[%c8, %c0_48] : memref<40x32xf32, #tpu.memory_space<vmem>>, vector<8x32xf32>
    tpu.vector_store %arg13[%c8, %c0_48], %124 {strides = array<i32>} : memref<40x32xf32, #tpu.memory_space<vmem>>, vector<8x32xf32>,
    %126 = vector.extract_strided_slice %5 {offsets = [16, 0], sizes = [8, 128], strides = [1, 1]} : vector<40x128xf32> to vector<8x128xf32>
    %127 = arith.truncf %97 : vector<8x32xf32> to vector<8x32xbf16>
    %c0_49 = arith.constant 0 : index
    %c0_50 = arith.constant 0 : index
    %128 = vector.load %arg4[%c0_49, %c0_50] : memref<32x128xbf16, #tpu.memory_space<vmem>>, vector<32x128xbf16>
    %cst_51 = arith.constant dense<0.000000e+00> : vector<8x128xf32>
    %129 = tpu.matmul %127, %128, %cst_51 {dimension_numbers = #tpu.dot_dimension_numbers<[1], [0], [0], [1], [0, 0, 1, 1], [], []>} : vector<8x32xbf16>, vector<32x128xbf16>, vector<8x128xf32> -> vector<8x128xf32>
    %130 = arith.addf %126, %129 : vector<8x128xf32>
    %131 = arith.negf %130 : vector<8x128xf32>
    %132 = math.exp %131 : vector<8x128xf32>
    %cst_52 = arith.constant 1.000000e+00 : f32
    %133 = vector.broadcast %cst_52 : f32 to vector<8x128xf32>
    %134 = arith.addf %133, %132 : vector<8x128xf32>
    %135 = arith.divf %133, %134 : vector<8x128xf32>
    %cst_53 = arith.constant 2.000000e+00 : f32
    %136 = vector.broadcast %cst_53 : f32 to vector<8x128xf32>
    %137 = arith.mulf %136, %135 : vector<8x128xf32>
    %cst_54 = arith.constant 1.000000e+00 : f32
    %138 = vector.broadcast %cst_54 : f32 to vector<8x128xf32>
    %139 = arith.subf %137, %138 : vector<8x128xf32>
    %140 = arith.select %17, %139, %135 : vector<8x128xi1>, vector<8x128xf32>
    %141 = vector.extract_strided_slice %140 {offsets = [0, 0], sizes = [8, 32], strides = [1, 1]} : vector<8x128xf32> to vector<8x32xf32>
    %142 = vector.extract_strided_slice %140 {offsets = [0, 32], sizes = [8, 32], strides = [1, 1]} : vector<8x128xf32> to vector<8x32xf32>
    %143 = vector.extract_strided_slice %140 {offsets = [0, 64], sizes = [8, 32], strides = [1, 1]} : vector<8x128xf32> to vector<8x32xf32>
    %144 = vector.extract_strided_slice %140 {offsets = [0, 96], sizes = [8, 32], strides = [1, 1]} : vector<8x128xf32> to vector<8x32xf32>
    %145 = arith.mulf %142, %95 : vector<8x32xf32>
    %146 = arith.mulf %141, %143 : vector<8x32xf32>
    %147 = arith.addf %145, %146 : vector<8x32xf32>
    %148 = math.tanh %147 : vector<8x32xf32>
    %149 = arith.mulf %144, %148 : vector<8x32xf32>
    %150 = arith.truncf %149 : vector<8x32xf32> to vector<8x32xbf16>
    %c0_55 = arith.constant 0 : index
    %c0_56 = arith.constant 0 : index
    %151 = vector.load %arg7[%c0_55, %c0_56] : memref<32x128xbf16, #tpu.memory_space<vmem>>, vector<32x128xbf16>
    %cst_57 = arith.constant dense<0.000000e+00> : vector<8x128xf32>
    %152 = tpu.matmul %150, %151, %cst_57 {dimension_numbers = #tpu.dot_dimension_numbers<[1], [0], [0], [1], [0, 0, 1, 1], [], []>} : vector<8x32xbf16>, vector<32x128xbf16>, vector<8x128xf32> -> vector<8x128xf32>
    %153 = arith.addf %11, %152 : vector<8x128xf32>
    %154 = arith.truncf %124 : vector<8x32xf32> to vector<8x32xbf16>
    %c0_58 = arith.constant 0 : index
    %c0_59 = arith.constant 0 : index
    %155 = vector.load %arg8[%c0_58, %c0_59] : memref<32x128xbf16, #tpu.memory_space<vmem>>, vector<32x128xbf16>
    %cst_60 = arith.constant dense<0.000000e+00> : vector<8x128xf32>
    %156 = tpu.matmul %154, %155, %cst_60 {dimension_numbers = #tpu.dot_dimension_numbers<[1], [0], [0], [1], [0, 0, 1, 1], [], []>} : vector<8x32xbf16>, vector<32x128xbf16>, vector<8x128xf32> -> vector<8x128xf32>
    %157 = arith.addf %153, %156 : vector<8x128xf32>
    %158 = arith.negf %157 : vector<8x128xf32>
    %159 = math.exp %158 : vector<8x128xf32>
    %cst_61 = arith.constant 1.000000e+00 : f32
    %160 = vector.broadcast %cst_61 : f32 to vector<8x128xf32>
    %161 = arith.addf %160, %159 : vector<8x128xf32>
    %162 = arith.divf %160, %161 : vector<8x128xf32>
    %cst_62 = arith.constant 2.000000e+00 : f32
    %163 = vector.broadcast %cst_62 : f32 to vector<8x128xf32>
    %164 = arith.mulf %163, %162 : vector<8x128xf32>
    %cst_63 = arith.constant 1.000000e+00 : f32
    %165 = vector.broadcast %cst_63 : f32 to vector<8x128xf32>
    %166 = arith.subf %164, %165 : vector<8x128xf32>
    %167 = arith.select %17, %166, %162 : vector<8x128xi1>, vector<8x128xf32>
    %168 = vector.extract_strided_slice %167 {offsets = [0, 0], sizes = [8, 32], strides = [1, 1]} : vector<8x128xf32> to vector<8x32xf32>
    %169 = vector.extract_strided_slice %167 {offsets = [0, 32], sizes = [8, 32], strides = [1, 1]} : vector<8x128xf32> to vector<8x32xf32>
    %170 = vector.extract_strided_slice %167 {offsets = [0, 64], sizes = [8, 32], strides = [1, 1]} : vector<8x128xf32> to vector<8x32xf32>
    %171 = vector.extract_strided_slice %167 {offsets = [0, 96], sizes = [8, 32], strides = [1, 1]} : vector<8x128xf32> to vector<8x32xf32>
    %172 = arith.mulf %169, %122 : vector<8x32xf32>
    %173 = arith.mulf %168, %170 : vector<8x32xf32>
    %174 = arith.addf %172, %173 : vector<8x32xf32>
    %175 = math.tanh %174 : vector<8x32xf32>
    %176 = arith.mulf %171, %175 : vector<8x32xf32>
    %c16 = arith.constant 16 : index
    %c0_64 = arith.constant 0 : index
    %177 = vector.load %arg13[%c16, %c0_64] : memref<40x32xf32, #tpu.memory_space<vmem>>, vector<8x32xf32>
    tpu.vector_store %arg13[%c16, %c0_64], %176 {strides = array<i32>} : memref<40x32xf32, #tpu.memory_space<vmem>>, vector<8x32xf32>,
    %178 = vector.extract_strided_slice %5 {offsets = [24, 0], sizes = [8, 128], strides = [1, 1]} : vector<40x128xf32> to vector<8x128xf32>
    %179 = arith.truncf %149 : vector<8x32xf32> to vector<8x32xbf16>
    %c0_65 = arith.constant 0 : index
    %c0_66 = arith.constant 0 : index
    %180 = vector.load %arg4[%c0_65, %c0_66] : memref<32x128xbf16, #tpu.memory_space<vmem>>, vector<32x128xbf16>
    %cst_67 = arith.constant dense<0.000000e+00> : vector<8x128xf32>
    %181 = tpu.matmul %179, %180, %cst_67 {dimension_numbers = #tpu.dot_dimension_numbers<[1], [0], [0], [1], [0, 0, 1, 1], [], []>} : vector<8x32xbf16>, vector<32x128xbf16>, vector<8x128xf32> -> vector<8x128xf32>
    %182 = arith.addf %178, %181 : vector<8x128xf32>
    %183 = arith.negf %182 : vector<8x128xf32>
    %184 = math.exp %183 : vector<8x128xf32>
    %cst_68 = arith.constant 1.000000e+00 : f32
    %185 = vector.broadcast %cst_68 : f32 to vector<8x128xf32>
    %186 = arith.addf %185, %184 : vector<8x128xf32>
    %187 = arith.divf %185, %186 : vector<8x128xf32>
    %cst_69 = arith.constant 2.000000e+00 : f32
    %188 = vector.broadcast %cst_69 : f32 to vector<8x128xf32>
    %189 = arith.mulf %188, %187 : vector<8x128xf32>
    %cst_70 = arith.constant 1.000000e+00 : f32
    %190 = vector.broadcast %cst_70 : f32 to vector<8x128xf32>
    %191 = arith.subf %189, %190 : vector<8x128xf32>
    %192 = arith.select %17, %191, %187 : vector<8x128xi1>, vector<8x128xf32>
    %193 = vector.extract_strided_slice %192 {offsets = [0, 0], sizes = [8, 32], strides = [1, 1]} : vector<8x128xf32> to vector<8x32xf32>
    %194 = vector.extract_strided_slice %192 {offsets = [0, 32], sizes = [8, 32], strides = [1, 1]} : vector<8x128xf32> to vector<8x32xf32>
    %195 = vector.extract_strided_slice %192 {offsets = [0, 64], sizes = [8, 32], strides = [1, 1]} : vector<8x128xf32> to vector<8x32xf32>
    %196 = vector.extract_strided_slice %192 {offsets = [0, 96], sizes = [8, 32], strides = [1, 1]} : vector<8x128xf32> to vector<8x32xf32>
    %197 = arith.mulf %194, %147 : vector<8x32xf32>
    %198 = arith.mulf %193, %195 : vector<8x32xf32>
    %199 = arith.addf %197, %198 : vector<8x32xf32>
    %200 = math.tanh %199 : vector<8x32xf32>
    %201 = arith.mulf %196, %200 : vector<8x32xf32>
    %202 = arith.truncf %201 : vector<8x32xf32> to vector<8x32xbf16>
    %c0_71 = arith.constant 0 : index
    %c0_72 = arith.constant 0 : index
    %203 = vector.load %arg7[%c0_71, %c0_72] : memref<32x128xbf16, #tpu.memory_space<vmem>>, vector<32x128xbf16>
    %cst_73 = arith.constant dense<0.000000e+00> : vector<8x128xf32>
    %204 = tpu.matmul %202, %203, %cst_73 {dimension_numbers = #tpu.dot_dimension_numbers<[1], [0], [0], [1], [0, 0, 1, 1], [], []>} : vector<8x32xbf16>, vector<32x128xbf16>, vector<8x128xf32> -> vector<8x128xf32>
    %205 = arith.addf %11, %204 : vector<8x128xf32>
    %206 = arith.truncf %176 : vector<8x32xf32> to vector<8x32xbf16>
    %c0_74 = arith.constant 0 : index
    %c0_75 = arith.constant 0 : index
    %207 = vector.load %arg8[%c0_74, %c0_75] : memref<32x128xbf16, #tpu.memory_space<vmem>>, vector<32x128xbf16>
    %cst_76 = arith.constant dense<0.000000e+00> : vector<8x128xf32>
    %208 = tpu.matmul %206, %207, %cst_76 {dimension_numbers = #tpu.dot_dimension_numbers<[1], [0], [0], [1], [0, 0, 1, 1], [], []>} : vector<8x32xbf16>, vector<32x128xbf16>, vector<8x128xf32> -> vector<8x128xf32>
    %209 = arith.addf %205, %208 : vector<8x128xf32>
    %210 = arith.negf %209 : vector<8x128xf32>
    %211 = math.exp %210 : vector<8x128xf32>
    %cst_77 = arith.constant 1.000000e+00 : f32
    %212 = vector.broadcast %cst_77 : f32 to vector<8x128xf32>
    %213 = arith.addf %212, %211 : vector<8x128xf32>
    %214 = arith.divf %212, %213 : vector<8x128xf32>
    %cst_78 = arith.constant 2.000000e+00 : f32
    %215 = vector.broadcast %cst_78 : f32 to vector<8x128xf32>
    %216 = arith.mulf %215, %214 : vector<8x128xf32>
    %cst_79 = arith.constant 1.000000e+00 : f32
    %217 = vector.broadcast %cst_79 : f32 to vector<8x128xf32>
    %218 = arith.subf %216, %217 : vector<8x128xf32>
    %219 = arith.select %17, %218, %214 : vector<8x128xi1>, vector<8x128xf32>
    %220 = vector.extract_strided_slice %219 {offsets = [0, 0], sizes = [8, 32], strides = [1, 1]} : vector<8x128xf32> to vector<8x32xf32>
    %221 = vector.extract_strided_slice %219 {offsets = [0, 32], sizes = [8, 32], strides = [1, 1]} : vector<8x128xf32> to vector<8x32xf32>
    %222 = vector.extract_strided_slice %219 {offsets = [0, 64], sizes = [8, 32], strides = [1, 1]} : vector<8x128xf32> to vector<8x32xf32>
    %223 = vector.extract_strided_slice %219 {offsets = [0, 96], sizes = [8, 32], strides = [1, 1]} : vector<8x128xf32> to vector<8x32xf32>
    %224 = arith.mulf %221, %174 : vector<8x32xf32>
    %225 = arith.mulf %220, %222 : vector<8x32xf32>
    %226 = arith.addf %224, %225 : vector<8x32xf32>
    %227 = math.tanh %226 : vector<8x32xf32>
    %228 = arith.mulf %223, %227 : vector<8x32xf32>
    %c24 = arith.constant 24 : index
    %c0_80 = arith.constant 0 : index
    %229 = vector.load %arg13[%c24, %c0_80] : memref<40x32xf32, #tpu.memory_space<vmem>>, vector<8x32xf32>
    tpu.vector_store %arg13[%c24, %c0_80], %228 {strides = array<i32>} : memref<40x32xf32, #tpu.memory_space<vmem>>, vector<8x32xf32>,
    %230 = vector.extract_strided_slice %5 {offsets = [32, 0], sizes = [8, 128], strides = [1, 1]} : vector<40x128xf32> to vector<8x128xf32>
    %231 = arith.truncf %201 : vector<8x32xf32> to vector<8x32xbf16>
    %c0_81 = arith.constant 0 : index
    %c0_82 = arith.constant 0 : index
    %232 = vector.load %arg4[%c0_81, %c0_82] : memref<32x128xbf16, #tpu.memory_space<vmem>>, vector<32x128xbf16>
    %cst_83 = arith.constant dense<0.000000e+00> : vector<8x128xf32>
    %233 = tpu.matmul %231, %232, %cst_83 {dimension_numbers = #tpu.dot_dimension_numbers<[1], [0], [0], [1], [0, 0, 1, 1], [], []>} : vector<8x32xbf16>, vector<32x128xbf16>, vector<8x128xf32> -> vector<8x128xf32>
    %234 = arith.addf %230, %233 : vector<8x128xf32>
    %235 = arith.negf %234 : vector<8x128xf32>
    %236 = math.exp %235 : vector<8x128xf32>
    %cst_84 = arith.constant 1.000000e+00 : f32
    %237 = vector.broadcast %cst_84 : f32 to vector<8x128xf32>
    %238 = arith.addf %237, %236 : vector<8x128xf32>
    %239 = arith.divf %237, %238 : vector<8x128xf32>
    %cst_85 = arith.constant 2.000000e+00 : f32
    %240 = vector.broadcast %cst_85 : f32 to vector<8x128xf32>
    %241 = arith.mulf %240, %239 : vector<8x128xf32>
    %cst_86 = arith.constant 1.000000e+00 : f32
    %242 = vector.broadcast %cst_86 : f32 to vector<8x128xf32>
    %243 = arith.subf %241, %242 : vector<8x128xf32>
    %244 = arith.select %17, %243, %239 : vector<8x128xi1>, vector<8x128xf32>
    %245 = vector.extract_strided_slice %244 {offsets = [0, 0], sizes = [8, 32], strides = [1, 1]} : vector<8x128xf32> to vector<8x32xf32>
    %246 = vector.extract_strided_slice %244 {offsets = [0, 32], sizes = [8, 32], strides = [1, 1]} : vector<8x128xf32> to vector<8x32xf32>
    %247 = vector.extract_strided_slice %244 {offsets = [0, 64], sizes = [8, 32], strides = [1, 1]} : vector<8x128xf32> to vector<8x32xf32>
    %248 = vector.extract_strided_slice %244 {offsets = [0, 96], sizes = [8, 32], strides = [1, 1]} : vector<8x128xf32> to vector<8x32xf32>
    %249 = arith.mulf %246, %199 : vector<8x32xf32>
    %250 = arith.mulf %245, %247 : vector<8x32xf32>
    %251 = arith.addf %249, %250 : vector<8x32xf32>
    %252 = math.tanh %251 : vector<8x32xf32>
    %253 = arith.mulf %248, %252 : vector<8x32xf32>
    %254 = arith.truncf %253 : vector<8x32xf32> to vector<8x32xbf16>
    %c0_87 = arith.constant 0 : index
    %c0_88 = arith.constant 0 : index
    %255 = vector.load %arg7[%c0_87, %c0_88] : memref<32x128xbf16, #tpu.memory_space<vmem>>, vector<32x128xbf16>
    %cst_89 = arith.constant dense<0.000000e+00> : vector<8x128xf32>
    %256 = tpu.matmul %254, %255, %cst_89 {dimension_numbers = #tpu.dot_dimension_numbers<[1], [0], [0], [1], [0, 0, 1, 1], [], []>} : vector<8x32xbf16>, vector<32x128xbf16>, vector<8x128xf32> -> vector<8x128xf32>
    %257 = arith.addf %11, %256 : vector<8x128xf32>
    %258 = arith.truncf %228 : vector<8x32xf32> to vector<8x32xbf16>
    %c0_90 = arith.constant 0 : index
    %c0_91 = arith.constant 0 : index
    %259 = vector.load %arg8[%c0_90, %c0_91] : memref<32x128xbf16, #tpu.memory_space<vmem>>, vector<32x128xbf16>
    %cst_92 = arith.constant dense<0.000000e+00> : vector<8x128xf32>
    %260 = tpu.matmul %258, %259, %cst_92 {dimension_numbers = #tpu.dot_dimension_numbers<[1], [0], [0], [1], [0, 0, 1, 1], [], []>} : vector<8x32xbf16>, vector<32x128xbf16>, vector<8x128xf32> -> vector<8x128xf32>
    %261 = arith.addf %257, %260 : vector<8x128xf32>
    %262 = arith.negf %261 : vector<8x128xf32>
    %263 = math.exp %262 : vector<8x128xf32>
    %cst_93 = arith.constant 1.000000e+00 : f32
    %264 = vector.broadcast %cst_93 : f32 to vector<8x128xf32>
    %265 = arith.addf %264, %263 : vector<8x128xf32>
    %266 = arith.divf %264, %265 : vector<8x128xf32>
    %cst_94 = arith.constant 2.000000e+00 : f32
    %267 = vector.broadcast %cst_94 : f32 to vector<8x128xf32>
    %268 = arith.mulf %267, %266 : vector<8x128xf32>
    %cst_95 = arith.constant 1.000000e+00 : f32
    %269 = vector.broadcast %cst_95 : f32 to vector<8x128xf32>
    %270 = arith.subf %268, %269 : vector<8x128xf32>
    %271 = arith.select %17, %270, %266 : vector<8x128xi1>, vector<8x128xf32>
    %272 = vector.extract_strided_slice %271 {offsets = [0, 0], sizes = [8, 32], strides = [1, 1]} : vector<8x128xf32> to vector<8x32xf32>
    %273 = vector.extract_strided_slice %271 {offsets = [0, 32], sizes = [8, 32], strides = [1, 1]} : vector<8x128xf32> to vector<8x32xf32>
    %274 = vector.extract_strided_slice %271 {offsets = [0, 64], sizes = [8, 32], strides = [1, 1]} : vector<8x128xf32> to vector<8x32xf32>
    %275 = vector.extract_strided_slice %271 {offsets = [0, 96], sizes = [8, 32], strides = [1, 1]} : vector<8x128xf32> to vector<8x32xf32>
    %276 = arith.mulf %273, %226 : vector<8x32xf32>
    %277 = arith.mulf %272, %274 : vector<8x32xf32>
    %278 = arith.addf %276, %277 : vector<8x32xf32>
    %279 = math.tanh %278 : vector<8x32xf32>
    %280 = arith.mulf %275, %279 : vector<8x32xf32>
    %c32 = arith.constant 32 : index
    %c0_96 = arith.constant 0 : index
    %281 = vector.load %arg13[%c32, %c0_96] : memref<40x32xf32, #tpu.memory_space<vmem>>, vector<8x32xf32>
    tpu.vector_store %arg13[%c32, %c0_96], %280 {strides = array<i32>} : memref<40x32xf32, #tpu.memory_space<vmem>>, vector<8x32xf32>,
    %c0_97 = arith.constant 0 : index
    %c0_98 = arith.constant 0 : index
    %282 = vector.load %arg13[%c0_97, %c0_98] : memref<40x32xf32, #tpu.memory_space<vmem>>, vector<40x32xf32>
    %283 = arith.truncf %282 : vector<40x32xf32> to vector<40x32xbf16>
    %c0_99 = arith.constant 0 : index
    %c0_100 = arith.constant 0 : index
    %284 = vector.load %arg10[%c0_99, %c0_100] : memref<32x128xbf16, #tpu.memory_space<vmem>>, vector<32x128xbf16>
    %cst_101 = arith.constant dense<0.000000e+00> : vector<40x128xf32>
    %285 = tpu.matmul %283, %284, %cst_101 {dimension_numbers = #tpu.dot_dimension_numbers<[1], [0], [0], [1], [0, 0, 1, 1], [], []>} : vector<40x32xbf16>, vector<32x128xbf16>, vector<40x128xf32> -> vector<40x128xf32>
    %c0_102 = arith.constant 0 : index
    %c0_103 = arith.constant 0 : index
    %286 = vector.load %arg11[%c0_102, %c0_103] : memref<1x128xf32, #tpu.memory_space<vmem>>, vector<1x128xf32>
    %287 = vector.broadcast %286 : vector<1x128xf32> to vector<40x128xf32>
    %288 = arith.addf %285, %287 : vector<40x128xf32>
    %cst_104 = arith.constant dense<0xFF800000> : vector<40xf32>
    %289 = vector.multi_reduction <maximumf>, %288, %cst_104 [1] : vector<40x128xf32> to vector<40xf32>
    %290 = vector.shape_cast %289 : vector<40xf32> to vector<40x1xf32>
    %291 = vector.broadcast %290 : vector<40x1xf32> to vector<40x128xf32>
    %292 = arith.subf %288, %291 : vector<40x128xf32>
    %293 = math.exp %292 : vector<40x128xf32>
    %cst_105 = arith.constant dense<0.000000e+00> : vector<40xf32>
    %294 = vector.multi_reduction <add>, %293, %cst_105 [1] : vector<40x128xf32> to vector<40xf32>
    %295 = vector.shape_cast %294 : vector<40xf32> to vector<40x1xf32>
    %296 = math.log %295 : vector<40x1xf32>
    %297 = vector.broadcast %296 : vector<40x1xf32> to vector<40x128xf32>
    %298 = arith.subf %292, %297 : vector<40x128xf32>
    %c0_106 = arith.constant 0 : index
    %c0_107 = arith.constant 0 : index
    %299 = vector.load %arg12[%c0_106, %c0_107] : memref<40x128xf32, #tpu.memory_space<vmem>>, vector<40x128xf32>
    tpu.vector_store %arg12[%c0_106, %c0_107], %298 {strides = array<i32>} : memref<40x128xf32, #tpu.memory_space<vmem>>, vector<40x128xf32>,
    return
  }
  func.func @transform_0(%arg0: i32) -> (i32, i32) {
    %c0_i32 = arith.constant 0 : i32
    %c0_i32_0 = arith.constant 0 : i32
    %c0_i32_1 = arith.constant 0 : i32
    return %c0_i32, %c0_i32_0 : i32, i32
  }
  func.func @transform_1(%arg0: i32) -> (i32, i32) {
    %c0_i32 = arith.constant 0 : i32
    %c0_i32_0 = arith.constant 0 : i32
    %c0_i32_1 = arith.constant 0 : i32
    return %c0_i32, %c0_i32_0 : i32, i32
  }
  func.func @transform_2(%arg0: i32) -> (i32, i32) {
    %c0_i32 = arith.constant 0 : i32
    %c0_i32_0 = arith.constant 0 : i32
    %c0_i32_1 = arith.constant 0 : i32
    return %c0_i32, %c0_i32_0 : i32, i32
  }
  func.func @transform_3(%arg0: i32) -> (i32, i32) {
    %c0_i32 = arith.constant 0 : i32
    %c0_i32_0 = arith.constant 0 : i32
    %c0_i32_1 = arith.constant 0 : i32
    return %c0_i32, %c0_i32_0 : i32, i32
  }
  func.func @transform_4(%arg0: i32) -> (i32, i32) {
    %c0_i32 = arith.constant 0 : i32
    %c0_i32_0 = arith.constant 0 : i32
    %c0_i32_1 = arith.constant 0 : i32
    return %c0_i32, %c0_i32_0 : i32, i32
  }
  func.func @transform_5(%arg0: i32) -> (i32, i32) {
    %c0_i32 = arith.constant 0 : i32
    %c0_i32_0 = arith.constant 0 : i32
    %c0_i32_1 = arith.constant 0 : i32
    return %c0_i32, %c0_i32_0 : i32, i32
  }
  func.func @transform_6(%arg0: i32) -> (i32, i32) {
    %c0_i32 = arith.constant 0 : i32
    %c0_i32_0 = arith.constant 0 : i32
    %c0_i32_1 = arith.constant 0 : i32
    return %c0_i32, %c0_i32_0 : i32, i32
  }
  func.func @transform_7(%arg0: i32) -> (i32, i32) {
    %c0_i32 = arith.constant 0 : i32
    %c0_i32_0 = arith.constant 0 : i32
    %c0_i32_1 = arith.constant 0 : i32
    return %c0_i32, %c0_i32_0 : i32, i32
  }
  func.func @transform_8(%arg0: i32) -> (i32, i32) {
    %c0_i32 = arith.constant 0 : i32
    %c0_i32_0 = arith.constant 0 : i32
    %c0_i32_1 = arith.constant 0 : i32
    return %c0_i32, %c0_i32_0 : i32, i32
  }
  func.func @transform_9(%arg0: i32) -> (i32, i32) {
    %c0_i32 = arith.constant 0 : i32
    %c0_i32_0 = arith.constant 0 : i32
    %c0_i32_1 = arith.constant 0 : i32
    return %c0_i32, %c0_i32_0 : i32, i32
  }
  func.func @transform_10(%arg0: i32) -> (i32, i32) {
    %c0_i32 = arith.constant 0 : i32
    %c0_i32_0 = arith.constant 0 : i32
    %c0_i32_1 = arith.constant 0 : i32
    return %c0_i32, %c0_i32_0 : i32, i32
  }
  func.func @transform_11(%arg0: i32) -> (i32, i32) {
    %c0_i32 = arith.constant 0 : i32
    %c0_i32_0 = arith.constant 0 : i32
    %c0_i32_1 = arith.constant 0 : i32
    return %c0_i32, %c0_i32_0 : i32, i32
  }
}

</mosaic_0001>

<llo_original>
// kernel: tpu_custom_call.1
$region0: #{tpu_custom_call.1}
  #allocation0 [shape = 'u32[]', space=smem, size = 0x4, offset = 0x4, fixed_abs, tag = 'smem constant byte address 0x4 - core index']
  #allocation1 [shape = 'u32[144,128]{1,0:T(1,128)}', space=vmem, size = 0x12000, scoped, tag = 'internal scratch']
  #allocation2 [shape = 'f32[40,32]{1,0:T(8,128)}', space=vmem, size = 0x5000, scoped, tag = 'scratch operand']
  %s0 = inlined_call_operand.vmem [shape: bf16[40,16], index: 0, kind: input, shape index: {}]
  %s1 = inlined_call_operand.hbm [shape: bf16[8,8], index: 1, kind: input, shape index: {}]
  %s2 = inlined_call_operand.hbm [shape: bf16[16,128], index: 2, kind: input, shape index: {}]
  %s3 = inlined_call_operand.vmem [shape: bf16[32,128], index: 3, kind: input, shape index: {}]
  %s4 = inlined_call_operand.vmem [shape: f32[1,128], index: 4, kind: input, shape index: {}]
  %s5 = inlined_call_operand.hbm [shape: bf16[8,128], index: 5, kind: input, shape index: {}]
  %s6 = inlined_call_operand.vmem [shape: bf16[32,128], index: 6, kind: input, shape index: {}]
  %s7 = inlined_call_operand.vmem [shape: bf16[32,128], index: 7, kind: input, shape index: {}]
  %s8 = inlined_call_operand.vmem [shape: f32[1,128], index: 8, kind: input, shape index: {}]
  %s9 = inlined_call_operand.hbm [shape: bf16[32,128], index: 9, kind: input, shape index: {}]
  %s10 = inlined_call_operand.vmem [shape: f32[1,128], index: 10, kind: input, shape index: {}]
  %s11 = inlined_call_operand.hbm [shape: f32[40,128], index: 11, kind: output, shape index: {}]
  %s12 = sld [smem:[#allocation0]]
  $region70: #{tpu_custom_call.1} parent=0
    _
  %s14 = ssub.s32 1, %s12
  %s15 = scalar_select 0, %s14, %s12
  $region1: #{tpu_custom_call.1} parent=0
    #allocation3 [shape = 'u8[2048]{0}', space=vmem, size = 0x800, scoped, tag = 'input window, operand 1, single buffered']
    #allocation4 [shape = 's32[1]{0}', space=sflag, size = 0x4, scoped, tag = 'scoped memory for tpu_custom_call.1']
    #allocation5 [shape = 's32[1]{0}', space=sflag, size = 0x4, scoped, tag = 'scoped memory for tpu_custom_call.1']
    #allocation6 [shape = 'u8[4096]{0}', space=vmem, size = 0x1000, scoped, tag = 'input window, operand 2, single buffered']
    #allocation7 [shape = 's32[1]{0}', space=sflag, size = 0x4, scoped, tag = 'scoped memory for tpu_custom_call.1']
    #allocation8 [shape = 'u8[2048]{0}', space=vmem, size = 0x800, scoped, tag = 'input window, operand 5, single buffered']
    #allocation9 [shape = 'u8[8192]{0}', space=vmem, size = 0x2000, scoped, tag = 'input window, operand 9, single buffered']
    #allocation10 [shape = 's32[1]{0}', space=sflag, size = 0x4, scoped, tag = 'scoped memory for tpu_custom_call.1']
    #allocation11 [shape = 'u8[20480]{0}', space=vmem, size = 0x5000, scoped, tag = 'output window, operand 0, single buffered']
    %16 = vsyncpa [#allocation4], 0
    %17 = vsyncpa [#allocation7], 0
    %18 = vsyncpa [#allocation10], 0
    %19 = vsyncpa [#allocation5], 0
    // Predicated region
    $region2: #{tpu_custom_call.1} parent=1 // pred_check
      _
    $region3: #{tpu_custom_call.1} parent=1 // pred_check_branch
      %21 = sbr.rel (0) target = $region5
    $region4: #{tpu_custom_call.1} parent=1 // pred_region
      _
    $region5: #{tpu_custom_call.1} parent=1 // pred_fallthru
      _
    // Predicated region
    $region6: #{tpu_custom_call.1} parent=1 // pred_check
      _
    $region7: #{tpu_custom_call.1} parent=1 // pred_check_branch
      %23 = sbr.rel (0) target = $region9
    $region8: #{tpu_custom_call.1} parent=1 // pred_region
      %s25 = ssub.s32 64, 64
      %26 = vsyncadd [#allocation4], %s25
      %s28 = sshll.u32 [#allocation3], 4
      %s29 = int_to_ptr.vmem [resolvable:$true] %s28
      %31 = dma.hbm_to_vmem [thread:$0]  %s1, 64, %s29, [#allocation4]
    $region9: #{tpu_custom_call.1} parent=1 // pred_fallthru
      _
    // Predicated region
    $region10: #{tpu_custom_call.1} parent=1 // pred_check
      _
    $region11: #{tpu_custom_call.1} parent=1 // pred_check_branch
      %33 = sbr.rel (0) target = $region13
    $region12: #{tpu_custom_call.1} parent=1 // pred_region
      %s35 = ssub.s32 128, 128
      %36 = vsyncadd [#allocation7], %s35
      %s37 = sshll.u32 [#allocation6], 4
      %s38 = int_to_ptr.vmem [resolvable:$true] %s37
      %43 = dma.hbm_to_vmem [thread:$0]  %s2, 128, %s38, [#allocation7], 64, 64, 4
    $region13: #{tpu_custom_call.1} parent=1 // pred_fallthru
      _
    // Predicated region
    $region14: #{tpu_custom_call.1} parent=1 // pred_check
      _
    $region15: #{tpu_custom_call.1} parent=1 // pred_check_branch
      %45 = sbr.rel (0) target = $region17
    $region16: #{tpu_custom_call.1} parent=1 // pred_region
      _
    $region17: #{tpu_custom_call.1} parent=1 // pred_fallthru
      _
    // Predicated region
    $region18: #{tpu_custom_call.1} parent=1 // pred_check
      _
    $region19: #{tpu_custom_call.1} parent=1 // pred_check_branch
      %47 = sbr.rel (0) target = $region21
    $region20: #{tpu_custom_call.1} parent=1 // pred_region
      _
    $region21: #{tpu_custom_call.1} parent=1 // pred_fallthru
      _
    // Predicated region
    $region22: #{tpu_custom_call.1} parent=1 // pred_check
      _
    $region23: #{tpu_custom_call.1} parent=1 // pred_check_branch
      %49 = sbr.rel (0) target = $region25
    $region24: #{tpu_custom_call.1} parent=1 // pred_region
      %s51 = ssub.s32 64, 64
      %52 = vsyncadd [#allocation7], %s51
      %s54 = sshll.u32 [#allocation8], 4
      %s55 = int_to_ptr.vmem [resolvable:$true] %s54
      %57 = dma.hbm_to_vmem [thread:$0]  %s5, 64, %s55, [#allocation7]
    $region25: #{tpu_custom_call.1} parent=1 // pred_fallthru
      _
    // Predicated region
    $region26: #{tpu_custom_call.1} parent=1 // pred_check
      _
    $region27: #{tpu_custom_call.1} parent=1 // pred_check_branch
      %59 = sbr.rel (0) target = $region29
    $region28: #{tpu_custom_call.1} parent=1 // pred_region
      _
    $region29: #{tpu_custom_call.1} parent=1 // pred_fallthru
      _
    // Predicated region
    $region30: #{tpu_custom_call.1} parent=1 // pred_check
      _
    $region31: #{tpu_custom_call.1} parent=1 // pred_check_branch
      %61 = sbr.rel (0) target = $region33
    $region32: #{tpu_custom_call.1} parent=1 // pred_region
      _
    $region33: #{tpu_custom_call.1} parent=1 // pred_fallthru
      _
    // Predicated region
    $region34: #{tpu_custom_call.1} parent=1 // pred_check
      _
    $region35: #{tpu_custom_call.1} parent=1 // pred_check_branch
      %63 = sbr.rel (0) target = $region37
    $region36: #{tpu_custom_call.1} parent=1 // pred_region
      _
    $region37: #{tpu_custom_call.1} parent=1 // pred_fallthru
      _
    // Predicated region
    $region38: #{tpu_custom_call.1} parent=1 // pred_check
      _
    $region39: #{tpu_custom_call.1} parent=1 // pred_check_branch
      %65 = sbr.rel (0) target = $region41
    $region40: #{tpu_custom_call.1} parent=1 // pred_region
      %s67 = ssub.s32 256, 256
      %68 = vsyncadd [#allocation10], %s67
      %s69 = sshll.u32 [#allocation9], 4
      %s70 = int_to_ptr.vmem [resolvable:$true] %s69
      %75 = dma.hbm_to_vmem [thread:$0]  %s9, 256, %s70, [#allocation10], 64, 64, 4
    $region41: #{tpu_custom_call.1} parent=1 // pred_fallthru
      _
    // Predicated region
    $region42: #{tpu_custom_call.1} parent=1 // pred_check
      _
    $region43: #{tpu_custom_call.1} parent=1 // pred_check_branch
      %77 = sbr.rel (0) target = $region45
    $region44: #{tpu_custom_call.1} parent=1 // pred_region
      _
    $region45: #{tpu_custom_call.1} parent=1 // pred_fallthru
      _
    // Predicated region
    $region46: #{tpu_custom_call.1} parent=1 // pred_check
      _
    $region47: #{tpu_custom_call.1} parent=1 // pred_check_branch
      %79 = sbr.rel (0) target = $region49
    $region48: #{tpu_custom_call.1} parent=1 // pred_region
      %80 = dma.done [#allocation4], 64
    $region49: #{tpu_custom_call.1} parent=1 // pred_fallthru
      _
    // Predicated region
    $region50: #{tpu_custom_call.1} parent=1 // pred_check
      _
    $region51: #{tpu_custom_call.1} parent=1 // pred_check_branch
      %82 = sbr.rel (0) target = $region53
    $region52: #{tpu_custom_call.1} parent=1 // pred_region
      %83 = dma.done [#allocation7], 128
    $region53: #{tpu_custom_call.1} parent=1 // pred_fallthru
      _
    // Predicated region
    $region54: #{tpu_custom_call.1} parent=1 // pred_check
      _
    $region55: #{tpu_custom_call.1} parent=1 // pred_check_branch
      %85 = sbr.rel (0) target = $region57
    $region56: #{tpu_custom_call.1} parent=1 // pred_region
      %86 = dma.done [#allocation7], 64
    $region57: #{tpu_custom_call.1} parent=1 // pred_fallthru
      _
    // Predicated region
    $region58: #{tpu_custom_call.1} parent=1 // pred_check
      _
    $region59: #{tpu_custom_call.1} parent=1 // pred_check_branch
      %88 = sbr.rel (0) target = $region61
    $region60: #{tpu_custom_call.1} parent=1 // pred_region
      %89 = dma.done [#allocation10], 256
    $region61: #{tpu_custom_call.1} parent=1 // pred_fallthru
      _
    %v91 = vld [vmem:[%s0] sm:$0xf]
    %v92 = vld [vmem:[%s0 + $0x4] sm:$0xf]
    %v93 = vld [vmem:[%s0 + $0x8] sm:$0xf]
    %v94 = vld [vmem:[%s0 + $0xc] sm:$0xf]
    %v95 = vld [vmem:[%s0 + $0x10] sm:$0xf]
    %v96 = vld [vmem:[#allocation6] sm:$0xf]
    %v97 = vld [vmem:[#allocation6 + $0x4] sm:$0xf]
    %v98 = vld [vmem:[%s4] sm:$0x1]
    %v100 = vlaneseq
    %v101 = vshrl.u32 %v100, 7
    %v102 = vsub.s32 0, %v101
    %v103 = vrot.slane %v98, %v102
    %v110 = vunpack.c.l.b16 %v91
    %v111 = vunpack.c.l.b16 %v92
    %v112 = vunpack.c.l.b16 %v93
    %v113 = vunpack.c.l.b16 %v94
    %v114 = vunpack.c.l.b16 %v95
    %v115 = vpack.c.b16 %v111, %v110
    %v116 = vpack.c.b16 %v113, %v112
    %v117 = vpack.c.b16 %v114, %v114
    %v120 = vunpack.c.l.b16 %v96
    %v121 = vunpack.c.l.b16 %v97
    %v122 = vpack.c.b16 %v121, %v120
    %vm124 = vcmask 130048
    %v126 = vsel %vm124, %v115, 0
    %v129 = vsel %vm124, %v116, 0
    %v132 = vsel %vm124, %v117, 0
    %134 = vmatprep.subr.bf16.mxu0 0
    %135 = vmatpush1.bf16.msra.mxu0 %v122
    %136 = vmatprep.subr.bf16.mxu0 0
    %137 = vmatpush1.bf16.msra.mxu0 0
    %138 = vmatprep.subr.bf16.mxu0 0
    %139 = vmatpush1.bf16.msra.mxu0 0
    %140 = vmatprep.subr.bf16.mxu0 0
    %141 = vmatpush1.bf16.msra.mxu0 0
    %142 = vmatprep.subr.bf16.mxu0 0
    %143 = vmatpush1.bf16.msra.mxu0 0
    %144 = vmatprep.subr.bf16.mxu0 0
    %145 = vmatpush1.bf16.msra.mxu0 0
    %146 = vmatprep.subr.bf16.mxu0 0
    %147 = vmatpush1.bf16.msra.mxu0 0
    %148 = vmatprep.subr.bf16.mxu0 0
    %149 = vmatpush1.bf16.msra.mxu0 0
    %150 = vmatprep.subr.bf16.mxu0 0
    %151 = vmatpush1.bf16.msra.mxu0 0
    %152 = vmatprep.subr.bf16.mxu0 0
    %153 = vmatpush1.bf16.msra.mxu0 0
    %154 = vmatprep.subr.bf16.mxu0 0
    %155 = vmatpush1.bf16.msra.mxu0 0
    %156 = vmatprep.subr.bf16.mxu0 0
    %157 = vmatpush1.bf16.msra.mxu0 0
    %158 = vmatprep.subr.bf16.mxu0 0
    %159 = vmatpush1.bf16.msra.mxu0 0
    %160 = vmatprep.subr.bf16.mxu0 0
    %161 = vmatpush1.bf16.msra.mxu0 0
    %162 = vmatprep.subr.bf16.mxu0 0
    %163 = vmatpush1.bf16.msra.mxu0 0
    %164 = vmatprep.subr.bf16.mxu0 0
    %165 = vmatpush1.bf16.msra.mxu0 0
    %166 = vmatprep.mubr.bf16.mxu0 0
    %167 = vmatmul.mubr.bf16.gmra.mrb[0].mxu0 %v126
    %v168 = vpop.f32.mrb[0].mxu0
    %v169 = vadd.f32 %v103, %v168
    %v170 = vpop.f32.mrb[0].mxu0
    %v171 = vpop.f32.mrb[0].mxu0
    %v172 = vadd.f32 %v103, %v171
    %v173 = vpop.f32.mrb[0].mxu0
    %174 = vmatprep.mubr.bf16.mxu0 0
    %175 = vmatmul.mubr.bf16.gmra.mrb[0].mxu0 %v129
    %v176 = vpop.f32.mrb[0].mxu0
    %v177 = vadd.f32 %v103, %v176
    %v178 = vpop.f32.mrb[0].mxu0
    %v179 = vpop.f32.mrb[0].mxu0
    %v180 = vadd.f32 %v103, %v179
    %v181 = vpop.f32.mrb[0].mxu0
    %182 = vmatprep.mubr.bf16.mxu0 0
    %183 = vmatmul.mubr.bf16.gmra.mrb[0].mxu0 %v132
    %v184 = vpop.f32.mrb[0].mxu0
    %v185 = vadd.f32 %v103, %v184
    %v186 = vpop.f32.mrb[0].mxu0
    %v187 = vpop.f32.mrb[0].mxu0
    %v188 = vpop.f32.mrb[0].mxu0
    %189 = vdwg.mxu0
    %v190 = vld [vmem:[#allocation3] sm:$0xf]
    %v191 = vld [vmem:[#allocation8] sm:$0xf]
    %v192 = vld [vmem:[%s8] sm:$0x1]
    %v194 = vlaneseq
    %v195 = vshrl.u32 %v194, 7
    %v196 = vsub.s32 0, %v195
    %v197 = vrot.slane %v192, %v196
    %vm199 = vcmask 64512
    %v201 = vsel %vm199, %v190, 0
    %vm203 = vcmask 1043456
    %v205 = vsel %vm203, %v191, 0
    %207 = vmatprep.subr.bf16.mxu0 0
    %208 = vmatpush1.bf16.msra.mxu0 %v205
    %209 = vmatprep.subr.bf16.mxu0 0
    %210 = vmatpush1.bf16.msra.mxu0 0
    %211 = vmatprep.subr.bf16.mxu0 0
    %212 = vmatpush1.bf16.msra.mxu0 0
    %213 = vmatprep.subr.bf16.mxu0 0
    %214 = vmatpush1.bf16.msra.mxu0 0
    %215 = vmatprep.subr.bf16.mxu0 0
    %216 = vmatpush1.bf16.msra.mxu0 0
    %217 = vmatprep.subr.bf16.mxu0 0
    %218 = vmatpush1.bf16.msra.mxu0 0
    %219 = vmatprep.subr.bf16.mxu0 0
    %220 = vmatpush1.bf16.msra.mxu0 0
    %221 = vmatprep.subr.bf16.mxu0 0
    %222 = vmatpush1.bf16.msra.mxu0 0
    %223 = vmatprep.subr.bf16.mxu0 0
    %224 = vmatpush1.bf16.msra.mxu0 0
    %225 = vmatprep.subr.bf16.mxu0 0
    %226 = vmatpush1.bf16.msra.mxu0 0
    %227 = vmatprep.subr.bf16.mxu0 0
    %228 = vmatpush1.bf16.msra.mxu0 0
    %229 = vmatprep.subr.bf16.mxu0 0
    %230 = vmatpush1.bf16.msra.mxu0 0
    %231 = vmatprep.subr.bf16.mxu0 0
    %232 = vmatpush1.bf16.msra.mxu0 0
    %233 = vmatprep.subr.bf16.mxu0 0
    %234 = vmatpush1.bf16.msra.mxu0 0
    %235 = vmatprep.subr.bf16.mxu0 0
    %236 = vmatpush1.bf16.msra.mxu0 0
    %237 = vmatprep.subr.bf16.mxu0 0
    %238 = vmatpush1.bf16.msra.mxu0 0
    %239 = vmatprep.mubr.bf16.mxu0 0
    %240 = vmatmul.mubr.bf16.gmra.mrb[0].mxu0 %v201
    %v241 = vpop.f32.mrb[0].mxu0
    %v242 = vadd.f32 %v197, %v241
    %v243 = vpop.f32.mrb[0].mxu0
    %v244 = vpop.f32.mrb[0].mxu0
    %v245 = vpop.f32.mrb[0].mxu0
    %246 = vdwg.mxu0
    %v247 = vlaneseq
    %v248 = vand.u32 %v247, 127
    %vm249 = vcmp.ge.s32.totalorder %v248, 64
    %vm250 = vcmp.lt.s32.totalorder %v248, 96
    %vm251 = vmand %vm249, %vm250
    %v252 = vld [vmem:[%s3] sm:$0xf]
    %v253 = vld [vmem:[%s3 + $0x4] sm:$0xf]
    %v254 = vld [vmem:[%s3 + $0x8] sm:$0xf]
    %v255 = vld [vmem:[%s3 + $0xc] sm:$0xf]
    %v260 = vunpack.c.l.b16 %v252
    %v261 = vunpack.c.l.b16 %v253
    %v262 = vunpack.c.l.b16 %v254
    %v263 = vunpack.c.l.b16 %v255
    %v264 = vpack.c.b16 %v261, %v260
    %v265 = vpack.c.b16 %v263, %v262
    %vm268 = vcmask 261120
    %v270 = vsel %vm268, 0, 0
    %272 = vmatprep.subr.bf16.mxu0 0
    %273 = vmatpush1.bf16.msra.mxu0 %v264
    %274 = vmatprep.subr.bf16.mxu0 0
    %275 = vmatpush1.bf16.msra.mxu0 %v265
    %276 = vmatprep.subr.bf16.mxu0 0
    %277 = vmatpush1.bf16.msra.mxu0 0
    %278 = vmatprep.subr.bf16.mxu0 0
    %279 = vmatpush1.bf16.msra.mxu0 0
    %280 = vmatprep.subr.bf16.mxu0 0
    %281 = vmatpush1.bf16.msra.mxu0 0
    %282 = vmatprep.subr.bf16.mxu0 0
    %283 = vmatpush1.bf16.msra.mxu0 0
    %284 = vmatprep.subr.bf16.mxu0 0
    %285 = vmatpush1.bf16.msra.mxu0 0
    %286 = vmatprep.subr.bf16.mxu0 0
    %287 = vmatpush1.bf16.msra.mxu0 0
    %288 = vmatprep.subr.bf16.mxu0 0
    %289 = vmatpush1.bf16.msra.mxu0 0
    %290 = vmatprep.subr.bf16.mxu0 0
    %291 = vmatpush1.bf16.msra.mxu0 0
    %292 = vmatprep.subr.bf16.mxu0 0
    %293 = vmatpush1.bf16.msra.mxu0 0
    %294 = vmatprep.subr.bf16.mxu0 0
    %295 = vmatpush1.bf16.msra.mxu0 0
    %296 = vmatprep.subr.bf16.mxu0 0
    %297 = vmatpush1.bf16.msra.mxu0 0
    %298 = vmatprep.subr.bf16.mxu0 0
    %299 = vmatpush1.bf16.msra.mxu0 0
    %300 = vmatprep.subr.bf16.mxu0 0
    %301 = vmatpush1.bf16.msra.mxu0 0
    %302 = vmatprep.subr.bf16.mxu0 0
    %303 = vmatpush1.bf16.msra.mxu0 0
    %304 = vmatprep.mubr.bf16.mxu0 0
    %305 = vmatmul.mubr.bf16.gmra.mrb[0].mxu0 %v270
    %v306 = vpop.f32.mrb[0].mxu0
    %v307 = vadd.f32 0.0, %v306
    %v308 = vpop.f32.mrb[0].mxu0
    %v309 = vpop.f32.mrb[0].mxu0
    %v310 = vpop.f32.mrb[0].mxu0
    %311 = vdwg.mxu0
    %v312 = vadd.f32 %v169, %v307
    %v313 = vxor.u32 %v312, 2147483648
    %v314 = vmul.f32 %v313, 1.442695
    %v315 = vpow.pop %v314
    %v316 = vadd.f32 %v315, 1.0
    %v317 = vrcp.pop %v316
    %v318 = vmul.f32 1.0, %v317
    %v319 = vmul.f32 %v318, 2.0
    %v320 = vsub.f32 %v319, 1.0
    %v321 = vsel %vm251, %v320, %v318
    %v322 = vmul.f32 %v321, 0.0
    %324 = vrot.lane.b32.xlu0 %v321, 64
    %v325 = vpop.permute.xlu0 %324
    %v327 = vmul.f32 %v321, %v325
    %329 = vrot.lane.b32.xlu0 %v327, 32
    %v330 = vpop.permute.xlu0 %329
    %v332 = vadd.f32 %v322, %v330
    %v333 = vtanh.pop %v332
    %335 = vrot.lane.b32.xlu0 %v333, 64
    %v336 = vpop.permute.xlu0 %335
    %v338 = vmul.f32 %v321, %v336
    %v339 = vpack.c.bf16 %v338, %v338
    %v340 = vld [vmem:[%s6] sm:$0xf]
    %v341 = vld [vmem:[%s6 + $0x4] sm:$0xf]
    %v342 = vld [vmem:[%s6 + $0x8] sm:$0xf]
    %v343 = vld [vmem:[%s6 + $0xc] sm:$0xf]
    %345 = vrot.lane.b32.xlu0 %v339, 32
    %v346 = vpop.permute.xlu0 %345
    %v351 = vunpack.c.l.b16 %v340
    %v352 = vunpack.c.l.b16 %v341
    %v353 = vunpack.c.l.b16 %v342
    %v354 = vunpack.c.l.b16 %v343
    %v355 = vpack.c.b16 %v352, %v351
    %v356 = vpack.c.b16 %v354, %v353
    %v360 = vsel %vm268, %v346, 0
    %362 = vmatprep.subr.bf16.mxu0 0
    %363 = vmatpush1.bf16.msra.mxu0 %v355
    %364 = vmatprep.subr.bf16.mxu0 0
    %365 = vmatpush1.bf16.msra.mxu0 %v356
    %366 = vmatprep.subr.bf16.mxu0 0
    %367 = vmatpush1.bf16.msra.mxu0 0
    %368 = vmatprep.subr.bf16.mxu0 0
    %369 = vmatpush1.bf16.msra.mxu0 0
    %370 = vmatprep.subr.bf16.mxu0 0
    %371 = vmatpush1.bf16.msra.mxu0 0
    %372 = vmatprep.subr.bf16.mxu0 0
    %373 = vmatpush1.bf16.msra.mxu0 0
    %374 = vmatprep.subr.bf16.mxu0 0
    %375 = vmatpush1.bf16.msra.mxu0 0
    %376 = vmatprep.subr.bf16.mxu0 0
    %377 = vmatpush1.bf16.msra.mxu0 0
    %378 = vmatprep.subr.bf16.mxu0 0
    %379 = vmatpush1.bf16.msra.mxu0 0
    %380 = vmatprep.subr.bf16.mxu0 0
    %381 = vmatpush1.bf16.msra.mxu0 0
    %382 = vmatprep.subr.bf16.mxu0 0
    %383 = vmatpush1.bf16.msra.mxu0 0
    %384 = vmatprep.subr.bf16.mxu0 0
    %385 = vmatpush1.bf16.msra.mxu0 0
    %386 = vmatprep.subr.bf16.mxu0 0
    %387 = vmatpush1.bf16.msra.mxu0 0
    %388 = vmatprep.subr.bf16.mxu0 0
    %389 = vmatpush1.bf16.msra.mxu0 0
    %390 = vmatprep.subr.bf16.mxu0 0
    %391 = vmatpush1.bf16.msra.mxu0 0
    %392 = vmatprep.subr.bf16.mxu0 0
    %393 = vmatpush1.bf16.msra.mxu0 0
    %394 = vmatprep.mubr.bf16.mxu0 0
    %395 = vmatmul.mubr.bf16.gmra.mrb[0].mxu0 %v360
    %v396 = vpop.f32.mrb[0].mxu0
    %v397 = vadd.f32 0.0, %v396
    %v398 = vpop.f32.mrb[0].mxu0
    %v399 = vpop.f32.mrb[0].mxu0
    %v400 = vpop.f32.mrb[0].mxu0
    %401 = vdwg.mxu0
    %v402 = vadd.f32 %v242, %v397
    %v403 = vld [vmem:[%s7] sm:$0xf]
    %v404 = vld [vmem:[%s7 + $0x4] sm:$0xf]
    %v405 = vld [vmem:[%s7 + $0x8] sm:$0xf]
    %v406 = vld [vmem:[%s7 + $0xc] sm:$0xf]
    %v411 = vunpack.c.l.b16 %v403
    %v412 = vunpack.c.l.b16 %v404
    %v413 = vunpack.c.l.b16 %v405
    %v414 = vunpack.c.l.b16 %v406
    %v415 = vpack.c.b16 %v412, %v411
    %v416 = vpack.c.b16 %v414, %v413
    %419 = vmatprep.subr.bf16.mxu0 0
    %420 = vmatpush1.bf16.msra.mxu0 %v415
    %421 = vmatprep.subr.bf16.mxu0 0
    %422 = vmatpush1.bf16.msra.mxu0 %v416
    %423 = vmatprep.subr.bf16.mxu0 0
    %424 = vmatpush1.bf16.msra.mxu0 0
    %425 = vmatprep.subr.bf16.mxu0 0
    %426 = vmatpush1.bf16.msra.mxu0 0
    %427 = vmatprep.subr.bf16.mxu0 0
    %428 = vmatpush1.bf16.msra.mxu0 0
    %429 = vmatprep.subr.bf16.mxu0 0
    %430 = vmatpush1.bf16.msra.mxu0 0
    %431 = vmatprep.subr.bf16.mxu0 0
    %432 = vmatpush1.bf16.msra.mxu0 0
    %433 = vmatprep.subr.bf16.mxu0 0
    %434 = vmatpush1.bf16.msra.mxu0 0
    %435 = vmatprep.subr.bf16.mxu0 0
    %436 = vmatpush1.bf16.msra.mxu0 0
    %437 = vmatprep.subr.bf16.mxu0 0
    %438 = vmatpush1.bf16.msra.mxu0 0
    %439 = vmatprep.subr.bf16.mxu0 0
    %440 = vmatpush1.bf16.msra.mxu0 0
    %441 = vmatprep.subr.bf16.mxu0 0
    %442 = vmatpush1.bf16.msra.mxu0 0
    %443 = vmatprep.subr.bf16.mxu0 0
    %444 = vmatpush1.bf16.msra.mxu0 0
    %445 = vmatprep.subr.bf16.mxu0 0
    %446 = vmatpush1.bf16.msra.mxu0 0
    %447 = vmatprep.subr.bf16.mxu0 0
    %448 = vmatpush1.bf16.msra.mxu0 0
    %449 = vmatprep.subr.bf16.mxu0 0
    %450 = vmatpush1.bf16.msra.mxu0 0
    %451 = vmatprep.mubr.bf16.mxu0 0
    %452 = vmatmul.mubr.bf16.gmra.mrb[0].mxu0 %v270
    %v453 = vpop.f32.mrb[0].mxu0
    %v454 = vadd.f32 0.0, %v453
    %v455 = vpop.f32.mrb[0].mxu0
    %v456 = vpop.f32.mrb[0].mxu0
    %v457 = vpop.f32.mrb[0].mxu0
    %458 = vdwg.mxu0
    %v459 = vadd.f32 %v402, %v454
    %v460 = vxor.u32 %v459, 2147483648
    %v461 = vmul.f32 %v460, 1.442695
    %v462 = vpow.pop %v461
    %v463 = vadd.f32 %v462, 1.0
    %v464 = vrcp.pop %v463
    %v465 = vmul.f32 1.0, %v464
    %v466 = vmul.f32 %v465, 2.0
    %v467 = vsub.f32 %v466, 1.0
    %v468 = vsel %vm251, %v467, %v465
    %v469 = vmul.f32 %v468, 0.0
    %471 = vrot.lane.b32.xlu0 %v468, 64
    %v472 = vpop.permute.xlu0 %471
    %v474 = vmul.f32 %v468, %v472
    %476 = vrot.lane.b32.xlu0 %v474, 32
    %v477 = vpop.permute.xlu0 %476
    %v479 = vadd.f32 %v469, %v477
    %v480 = vtanh.pop %v479
    %482 = vrot.lane.b32.xlu0 %v480, 64
    %v483 = vpop.permute.xlu0 %482
    %v485 = vmul.f32 %v468, %v483
    %487 = vrot.lane.b32.xlu0 %v485, 32
    %v488 = vpop.permute.xlu0 %487
    %490 = vst.msk [vmem:[#allocation2] sm:$0xff] %vm268, %v488
    %v491 = vld [vmem:[%s3] sm:$0xf]
    %v492 = vld [vmem:[%s3 + $0x4] sm:$0xf]
    %v493 = vld [vmem:[%s3 + $0x8] sm:$0xf]
    %v494 = vld [vmem:[%s3 + $0xc] sm:$0xf]
    %v499 = vunpack.c.l.b16 %v491
    %v500 = vunpack.c.l.b16 %v492
    %v501 = vunpack.c.l.b16 %v493
    %v502 = vunpack.c.l.b16 %v494
    %v503 = vpack.c.b16 %v500, %v499
    %v504 = vpack.c.b16 %v502, %v501
    %507 = vmatprep.subr.bf16.mxu0 0
    %508 = vmatpush1.bf16.msra.mxu0 %v503
    %509 = vmatprep.subr.bf16.mxu0 0
    %510 = vmatpush1.bf16.msra.mxu0 %v504
    %511 = vmatprep.subr.bf16.mxu0 0
    %512 = vmatpush1.bf16.msra.mxu0 0
    %513 = vmatprep.subr.bf16.mxu0 0
    %514 = vmatpush1.bf16.msra.mxu0 0
    %515 = vmatprep.subr.bf16.mxu0 0
    %516 = vmatpush1.bf16.msra.mxu0 0
    %517 = vmatprep.subr.bf16.mxu0 0
    %518 = vmatpush1.bf16.msra.mxu0 0
    %519 = vmatprep.subr.bf16.mxu0 0
    %520 = vmatpush1.bf16.msra.mxu0 0
    %521 = vmatprep.subr.bf16.mxu0 0
    %522 = vmatpush1.bf16.msra.mxu0 0
    %523 = vmatprep.subr.bf16.mxu0 0
    %524 = vmatpush1.bf16.msra.mxu0 0
    %525 = vmatprep.subr.bf16.mxu0 0
    %526 = vmatpush1.bf16.msra.mxu0 0
    %527 = vmatprep.subr.bf16.mxu0 0
    %528 = vmatpush1.bf16.msra.mxu0 0
    %529 = vmatprep.subr.bf16.mxu0 0
    %530 = vmatpush1.bf16.msra.mxu0 0
    %531 = vmatprep.subr.bf16.mxu0 0
    %532 = vmatpush1.bf16.msra.mxu0 0
    %533 = vmatprep.subr.bf16.mxu0 0
    %534 = vmatpush1.bf16.msra.mxu0 0
    %535 = vmatprep.subr.bf16.mxu0 0
    %536 = vmatpush1.bf16.msra.mxu0 0
    %537 = vmatprep.subr.bf16.mxu0 0
    %538 = vmatpush1.bf16.msra.mxu0 0
    %539 = vmatprep.mubr.bf16.mxu0 0
    %540 = vmatmul.mubr.bf16.gmra.mrb[0].mxu0 %v360
    %v541 = vpop.f32.mrb[0].mxu0
    %v542 = vadd.f32 0.0, %v541
    %v543 = vpop.f32.mrb[0].mxu0
    %v544 = vpop.f32.mrb[0].mxu0
    %v545 = vpop.f32.mrb[0].mxu0
    %546 = vdwg.mxu0
    %v547 = vadd.f32 %v172, %v542
    %v548 = vxor.u32 %v547, 2147483648
    %v549 = vmul.f32 %v548, 1.442695
    %v550 = vpow.pop %v549
    %v551 = vadd.f32 %v550, 1.0
    %v552 = vrcp.pop %v551
    %v553 = vmul.f32 1.0, %v552
    %v554 = vmul.f32 %v553, 2.0
    %v555 = vsub.f32 %v554, 1.0
    %v556 = vsel %vm251, %v555, %v553
    %v557 = vmul.f32 %v556, %v332
    %559 = vrot.lane.b32.xlu0 %v556, 64
    %v560 = vpop.permute.xlu0 %559
    %v562 = vmul.f32 %v556, %v560
    %564 = vrot.lane.b32.xlu0 %v562, 32
    %v565 = vpop.permute.xlu0 %564
    %v567 = vadd.f32 %v557, %v565
    %v568 = vtanh.pop %v567
    %570 = vrot.lane.b32.xlu0 %v568, 64
    %v571 = vpop.permute.xlu0 %570
    %v573 = vmul.f32 %v556, %v571
    %v574 = vpack.c.bf16 %v573, %v573
    %v575 = vld [vmem:[%s6] sm:$0xf]
    %v576 = vld [vmem:[%s6 + $0x4] sm:$0xf]
    %v577 = vld [vmem:[%s6 + $0x8] sm:$0xf]
    %v578 = vld [vmem:[%s6 + $0xc] sm:$0xf]
    %580 = vrot.lane.b32.xlu0 %v574, 32
    %v581 = vpop.permute.xlu0 %580
    %v586 = vunpack.c.l.b16 %v575
    %v587 = vunpack.c.l.b16 %v576
    %v588 = vunpack.c.l.b16 %v577
    %v589 = vunpack.c.l.b16 %v578
    %v590 = vpack.c.b16 %v587, %v586
    %v591 = vpack.c.b16 %v589, %v588
    %v595 = vsel %vm268, %v581, 0
    %597 = vmatprep.subr.bf16.mxu0 0
    %598 = vmatpush1.bf16.msra.mxu0 %v590
    %599 = vmatprep.subr.bf16.mxu0 0
    %600 = vmatpush1.bf16.msra.mxu0 %v591
    %601 = vmatprep.subr.bf16.mxu0 0
    %602 = vmatpush1.bf16.msra.mxu0 0
    %603 = vmatprep.subr.bf16.mxu0 0
    %604 = vmatpush1.bf16.msra.mxu0 0
    %605 = vmatprep.subr.bf16.mxu0 0
    %606 = vmatpush1.bf16.msra.mxu0 0
    %607 = vmatprep.subr.bf16.mxu0 0
    %608 = vmatpush1.bf16.msra.mxu0 0
    %609 = vmatprep.subr.bf16.mxu0 0
    %610 = vmatpush1.bf16.msra.mxu0 0
    %611 = vmatprep.subr.bf16.mxu0 0
    %612 = vmatpush1.bf16.msra.mxu0 0
    %613 = vmatprep.subr.bf16.mxu0 0
    %614 = vmatpush1.bf16.msra.mxu0 0
    %615 = vmatprep.subr.bf16.mxu0 0
    %616 = vmatpush1.bf16.msra.mxu0 0
    %617 = vmatprep.subr.bf16.mxu0 0
    %618 = vmatpush1.bf16.msra.mxu0 0
    %619 = vmatprep.subr.bf16.mxu0 0
    %620 = vmatpush1.bf16.msra.mxu0 0
    %621 = vmatprep.subr.bf16.mxu0 0
    %622 = vmatpush1.bf16.msra.mxu0 0
    %623 = vmatprep.subr.bf16.mxu0 0
    %624 = vmatpush1.bf16.msra.mxu0 0
    %625 = vmatprep.subr.bf16.mxu0 0
    %626 = vmatpush1.bf16.msra.mxu0 0
    %627 = vmatprep.subr.bf16.mxu0 0
    %628 = vmatpush1.bf16.msra.mxu0 0
    %629 = vmatprep.mubr.bf16.mxu0 0
    %630 = vmatmul.mubr.bf16.gmra.mrb[0].mxu0 %v595
    %v631 = vpop.f32.mrb[0].mxu0
    %v632 = vadd.f32 0.0, %v631
    %v633 = vpop.f32.mrb[0].mxu0
    %v634 = vpop.f32.mrb[0].mxu0
    %v635 = vpop.f32.mrb[0].mxu0
    %636 = vdwg.mxu0
    %v637 = vadd.f32 %v242, %v632
    %v638 = vpack.c.bf16 %v485, %v485
    %v639 = vld [vmem:[%s7] sm:$0xf]
    %v640 = vld [vmem:[%s7 + $0x4] sm:$0xf]
    %v641 = vld [vmem:[%s7 + $0x8] sm:$0xf]
    %v642 = vld [vmem:[%s7 + $0xc] sm:$0xf]
    %644 = vrot.lane.b32.xlu0 %v638, 32
    %v645 = vpop.permute.xlu0 %644
    %v650 = vunpack.c.l.b16 %v639
    %v651 = vunpack.c.l.b16 %v640
    %v652 = vunpack.c.l.b16 %v641
    %v653 = vunpack.c.l.b16 %v642
    %v654 = vpack.c.b16 %v651, %v650
    %v655 = vpack.c.b16 %v653, %v652
    %v659 = vsel %vm268, %v645, 0
    %661 = vmatprep.subr.bf16.mxu0 0
    %662 = vmatpush1.bf16.msra.mxu0 %v654
    %663 = vmatprep.subr.bf16.mxu0 0
    %664 = vmatpush1.bf16.msra.mxu0 %v655
    %665 = vmatprep.subr.bf16.mxu0 0
    %666 = vmatpush1.bf16.msra.mxu0 0
    %667 = vmatprep.subr.bf16.mxu0 0
    %668 = vmatpush1.bf16.msra.mxu0 0
    %669 = vmatprep.subr.bf16.mxu0 0
    %670 = vmatpush1.bf16.msra.mxu0 0
    %671 = vmatprep.subr.bf16.mxu0 0
    %672 = vmatpush1.bf16.msra.mxu0 0
    %673 = vmatprep.subr.bf16.mxu0 0
    %674 = vmatpush1.bf16.msra.mxu0 0
    %675 = vmatprep.subr.bf16.mxu0 0
    %676 = vmatpush1.bf16.msra.mxu0 0
    %677 = vmatprep.subr.bf16.mxu0 0
    %678 = vmatpush1.bf16.msra.mxu0 0
    %679 = vmatprep.subr.bf16.mxu0 0
    %680 = vmatpush1.bf16.msra.mxu0 0
    %681 = vmatprep.subr.bf16.mxu0 0
    %682 = vmatpush1.bf16.msra.mxu0 0
    %683 = vmatprep.subr.bf16.mxu0 0
    %684 = vmatpush1.bf16.msra.mxu0 0
    %685 = vmatprep.subr.bf16.mxu0 0
    %686 = vmatpush1.bf16.msra.mxu0 0
    %687 = vmatprep.subr.bf16.mxu0 0
    %688 = vmatpush1.bf16.msra.mxu0 0
    %689 = vmatprep.subr.bf16.mxu0 0
    %690 = vmatpush1.bf16.msra.mxu0 0
    %691 = vmatprep.subr.bf16.mxu0 0
    %692 = vmatpush1.bf16.msra.mxu0 0
    %693 = vmatprep.mubr.bf16.mxu0 0
    %694 = vmatmul.mubr.bf16.gmra.mrb[0].mxu0 %v659
    %v695 = vpop.f32.mrb[0].mxu0
    %v696 = vadd.f32 0.0, %v695
    %v697 = vpop.f32.mrb[0].mxu0
    %v698 = vpop.f32.mrb[0].mxu0
    %v699 = vpop.f32.mrb[0].mxu0
    %700 = vdwg.mxu0
    %v701 = vadd.f32 %v637, %v696
    %v702 = vxor.u32 %v701, 2147483648
    %v703 = vmul.f32 %v702, 1.442695
    %v704 = vpow.pop %v703
    %v705 = vadd.f32 %v704, 1.0
    %v706 = vrcp.pop %v705
    %v707 = vmul.f32 1.0, %v706
    %v708 = vmul.f32 %v707, 2.0
    %v709 = vsub.f32 %v708, 1.0
    %v710 = vsel %vm251, %v709, %v707
    %v711 = vmul.f32 %v710, %v479
    %713 = vrot.lane.b32.xlu0 %v710, 64
    %v714 = vpop.permute.xlu0 %713
    %v716 = vmul.f32 %v710, %v714
    %718 = vrot.lane.b32.xlu0 %v716, 32
    %v719 = vpop.permute.xlu0 %718
    %v721 = vadd.f32 %v711, %v719
    %v722 = vtanh.pop %v721
    %724 = vrot.lane.b32.xlu0 %v722, 64
    %v725 = vpop.permute.xlu0 %724
    %v727 = vmul.f32 %v710, %v725
    %729 = vrot.lane.b32.xlu0 %v727, 32
    %v730 = vpop.permute.xlu0 %729
    %732 = vst.msk [vmem:[#allocation2 + $0x8] sm:$0xff] %vm268, %v730
    %v733 = vld [vmem:[%s3] sm:$0xf]
    %v734 = vld [vmem:[%s3 + $0x4] sm:$0xf]
    %v735 = vld [vmem:[%s3 + $0x8] sm:$0xf]
    %v736 = vld [vmem:[%s3 + $0xc] sm:$0xf]
    %v741 = vunpack.c.l.b16 %v733
    %v742 = vunpack.c.l.b16 %v734
    %v743 = vunpack.c.l.b16 %v735
    %v744 = vunpack.c.l.b16 %v736
    %v745 = vpack.c.b16 %v742, %v741
    %v746 = vpack.c.b16 %v744, %v743
    %749 = vmatprep.subr.bf16.mxu0 0
    %750 = vmatpush1.bf16.msra.mxu0 %v745
    %751 = vmatprep.subr.bf16.mxu0 0
    %752 = vmatpush1.bf16.msra.mxu0 %v746
    %753 = vmatprep.subr.bf16.mxu0 0
    %754 = vmatpush1.bf16.msra.mxu0 0
    %755 = vmatprep.subr.bf16.mxu0 0
    %756 = vmatpush1.bf16.msra.mxu0 0
    %757 = vmatprep.subr.bf16.mxu0 0
    %758 = vmatpush1.bf16.msra.mxu0 0
    %759 = vmatprep.subr.bf16.mxu0 0
    %760 = vmatpush1.bf16.msra.mxu0 0
    %761 = vmatprep.subr.bf16.mxu0 0
    %762 = vmatpush1.bf16.msra.mxu0 0
    %763 = vmatprep.subr.bf16.mxu0 0
    %764 = vmatpush1.bf16.msra.mxu0 0
    %765 = vmatprep.subr.bf16.mxu0 0
    %766 = vmatpush1.bf16.msra.mxu0 0
    %767 = vmatprep.subr.bf16.mxu0 0
    %768 = vmatpush1.bf16.msra.mxu0 0
    %769 = vmatprep.subr.bf16.mxu0 0
    %770 = vmatpush1.bf16.msra.mxu0 0
    %771 = vmatprep.subr.bf16.mxu0 0
    %772 = vmatpush1.bf16.msra.mxu0 0
    %773 = vmatprep.subr.bf16.mxu0 0
    %774 = vmatpush1.bf16.msra.mxu0 0
    %775 = vmatprep.subr.bf16.mxu0 0
    %776 = vmatpush1.bf16.msra.mxu0 0
    %777 = vmatprep.subr.bf16.mxu0 0
    %778 = vmatpush1.bf16.msra.mxu0 0
    %779 = vmatprep.subr.bf16.mxu0 0
    %780 = vmatpush1.bf16.msra.mxu0 0
    %781 = vmatprep.mubr.bf16.mxu0 0
    %782 = vmatmul.mubr.bf16.gmra.mrb[0].mxu0 %v595
    %v783 = vpop.f32.mrb[0].mxu0
    %v784 = vadd.f32 0.0, %v783
    %v785 = vpop.f32.mrb[0].mxu0
    %v786 = vpop.f32.mrb[0].mxu0
    %v787 = vpop.f32.mrb[0].mxu0
    %788 = vdwg.mxu0
    %v789 = vadd.f32 %v177, %v784
    %v790 = vxor.u32 %v789, 2147483648
    %v791 = vmul.f32 %v790, 1.442695
    %v792 = vpow.pop %v791
    %v793 = vadd.f32 %v792, 1.0
    %v794 = vrcp.pop %v793
    %v795 = vmul.f32 1.0, %v794
    %v796 = vmul.f32 %v795, 2.0
    %v797 = vsub.f32 %v796, 1.0
    %v798 = vsel %vm251, %v797, %v795
    %v799 = vmul.f32 %v798, %v567
    %801 = vrot.lane.b32.xlu0 %v798, 64
    %v802 = vpop.permute.xlu0 %801
    %v804 = vmul.f32 %v798, %v802
    %806 = vrot.lane.b32.xlu0 %v804, 32
    %v807 = vpop.permute.xlu0 %806
    %v809 = vadd.f32 %v799, %v807
    %v810 = vtanh.pop %v809
    %812 = vrot.lane.b32.xlu0 %v810, 64
    %v813 = vpop.permute.xlu0 %812
    %v815 = vmul.f32 %v798, %v813
    %v816 = vpack.c.bf16 %v815, %v815
    %v817 = vld [vmem:[%s6] sm:$0xf]
    %v818 = vld [vmem:[%s6 + $0x4] sm:$0xf]
    %v819 = vld [vmem:[%s6 + $0x8] sm:$0xf]
    %v820 = vld [vmem:[%s6 + $0xc] sm:$0xf]
    %822 = vrot.lane.b32.xlu0 %v816, 32
    %v823 = vpop.permute.xlu0 %822
    %v828 = vunpack.c.l.b16 %v817
    %v829 = vunpack.c.l.b16 %v818
    %v830 = vunpack.c.l.b16 %v819
    %v831 = vunpack.c.l.b16 %v820
    %v832 = vpack.c.b16 %v829, %v828
    %v833 = vpack.c.b16 %v831, %v830
    %v837 = vsel %vm268, %v823, 0
    %839 = vmatprep.subr.bf16.mxu0 0
    %840 = vmatpush1.bf16.msra.mxu0 %v832
    %841 = vmatprep.subr.bf16.mxu0 0
    %842 = vmatpush1.bf16.msra.mxu0 %v833
    %843 = vmatprep.subr.bf16.mxu0 0
    %844 = vmatpush1.bf16.msra.mxu0 0
    %845 = vmatprep.subr.bf16.mxu0 0
    %846 = vmatpush1.bf16.msra.mxu0 0
    %847 = vmatprep.subr.bf16.mxu0 0
    %848 = vmatpush1.bf16.msra.mxu0 0
    %849 = vmatprep.subr.bf16.mxu0 0
    %850 = vmatpush1.bf16.msra.mxu0 0
    %851 = vmatprep.subr.bf16.mxu0 0
    %852 = vmatpush1.bf16.msra.mxu0 0
    %853 = vmatprep.subr.bf16.mxu0 0
    %854 = vmatpush1.bf16.msra.mxu0 0
    %855 = vmatprep.subr.bf16.mxu0 0
    %856 = vmatpush1.bf16.msra.mxu0 0
    %857 = vmatprep.subr.bf16.mxu0 0
    %858 = vmatpush1.bf16.msra.mxu0 0
    %859 = vmatprep.subr.bf16.mxu0 0
    %860 = vmatpush1.bf16.msra.mxu0 0
    %861 = vmatprep.subr.bf16.mxu0 0
    %862 = vmatpush1.bf16.msra.mxu0 0
    %863 = vmatprep.subr.bf16.mxu0 0
    %864 = vmatpush1.bf16.msra.mxu0 0
    %865 = vmatprep.subr.bf16.mxu0 0
    %866 = vmatpush1.bf16.msra.mxu0 0
    %867 = vmatprep.subr.bf16.mxu0 0
    %868 = vmatpush1.bf16.msra.mxu0 0
    %869 = vmatprep.subr.bf16.mxu0 0
    %870 = vmatpush1.bf16.msra.mxu0 0
    %871 = vmatprep.mubr.bf16.mxu0 0
    %872 = vmatmul.mubr.bf16.gmra.mrb[0].mxu0 %v837
    %v873 = vpop.f32.mrb[0].mxu0
    %v874 = vadd.f32 0.0, %v873
    %v875 = vpop.f32.mrb[0].mxu0
    %v876 = vpop.f32.mrb[0].mxu0
    %v877 = vpop.f32.mrb[0].mxu0
    %878 = vdwg.mxu0
    %v879 = vadd.f32 %v242, %v874
    %v880 = vpack.c.bf16 %v727, %v727
    %v881 = vld [vmem:[%s7] sm:$0xf]
    %v882 = vld [vmem:[%s7 + $0x4] sm:$0xf]
    %v883 = vld [vmem:[%s7 + $0x8] sm:$0xf]
    %v884 = vld [vmem:[%s7 + $0xc] sm:$0xf]
    %886 = vrot.lane.b32.xlu0 %v880, 32
    %v887 = vpop.permute.xlu0 %886
    %v892 = vunpack.c.l.b16 %v881
    %v893 = vunpack.c.l.b16 %v882
    %v894 = vunpack.c.l.b16 %v883
    %v895 = vunpack.c.l.b16 %v884
    %v896 = vpack.c.b16 %v893, %v892
    %v897 = vpack.c.b16 %v895, %v894
    %v901 = vsel %vm268, %v887, 0
    %903 = vmatprep.subr.bf16.mxu0 0
    %904 = vmatpush1.bf16.msra.mxu0 %v896
    %905 = vmatprep.subr.bf16.mxu0 0
    %906 = vmatpush1.bf16.msra.mxu0 %v897
    %907 = vmatprep.subr.bf16.mxu0 0
    %908 = vmatpush1.bf16.msra.mxu0 0
    %909 = vmatprep.subr.bf16.mxu0 0
    %910 = vmatpush1.bf16.msra.mxu0 0
    %911 = vmatprep.subr.bf16.mxu0 0
    %912 = vmatpush1.bf16.msra.mxu0 0
    %913 = vmatprep.subr.bf16.mxu0 0
    %914 = vmatpush1.bf16.msra.mxu0 0
    %915 = vmatprep.subr.bf16.mxu0 0
    %916 = vmatpush1.bf16.msra.mxu0 0
    %917 = vmatprep.subr.bf16.mxu0 0
    %918 = vmatpush1.bf16.msra.mxu0 0
    %919 = vmatprep.subr.bf16.mxu0 0
    %920 = vmatpush1.bf16.msra.mxu0 0
    %921 = vmatprep.subr.bf16.mxu0 0
    %922 = vmatpush1.bf16.msra.mxu0 0
    %923 = vmatprep.subr.bf16.mxu0 0
    %924 = vmatpush1.bf16.msra.mxu0 0
    %925 = vmatprep.subr.bf16.mxu0 0
    %926 = vmatpush1.bf16.msra.mxu0 0
    %927 = vmatprep.subr.bf16.mxu0 0
    %928 = vmatpush1.bf16.msra.mxu0 0
    %929 = vmatprep.subr.bf16.mxu0 0
    %930 = vmatpush1.bf16.msra.mxu0 0
    %931 = vmatprep.subr.bf16.mxu0 0
    %932 = vmatpush1.bf16.msra.mxu0 0
    %933 = vmatprep.subr.bf16.mxu0 0
    %934 = vmatpush1.bf16.msra.mxu0 0
    %935 = vmatprep.mubr.bf16.mxu0 0
    %936 = vmatmul.mubr.bf16.gmra.mrb[0].mxu0 %v901
    %v937 = vpop.f32.mrb[0].mxu0
    %v938 = vadd.f32 0.0, %v937
    %v939 = vpop.f32.mrb[0].mxu0
    %v940 = vpop.f32.mrb[0].mxu0
    %v941 = vpop.f32.mrb[0].mxu0
    %942 = vdwg.mxu0
    %v943 = vadd.f32 %v879, %v938
    %v944 = vxor.u32 %v943, 2147483648
    %v945 = vmul.f32 %v944, 1.442695
    %v946 = vpow.pop %v945
    %v947 = vadd.f32 %v946, 1.0
    %v948 = vrcp.pop %v947
    %v949 = vmul.f32 1.0, %v948
    %v950 = vmul.f32 %v949, 2.0
    %v951 = vsub.f32 %v950, 1.0
    %v952 = vsel %vm251, %v951, %v949
    %v953 = vmul.f32 %v952, %v721
    %955 = vrot.lane.b32.xlu0 %v952, 64
    %v956 = vpop.permute.xlu0 %955
    %v958 = vmul.f32 %v952, %v956
    %960 = vrot.lane.b32.xlu0 %v958, 32
    %v961 = vpop.permute.xlu0 %960
    %v963 = vadd.f32 %v953, %v961
    %v964 = vtanh.pop %v963
    %966 = vrot.lane.b32.xlu0 %v964, 64
    %v967 = vpop.permute.xlu0 %966
    %v969 = vmul.f32 %v952, %v967
    %971 = vrot.lane.b32.xlu0 %v969, 32
    %v972 = vpop.permute.xlu0 %971
    %974 = vst.msk [vmem:[#allocation2 + $0x10] sm:$0xff] %vm268, %v972
    %v975 = vld [vmem:[%s3] sm:$0xf]
    %v976 = vld [vmem:[%s3 + $0x4] sm:$0xf]
    %v977 = vld [vmem:[%s3 + $0x8] sm:$0xf]
    %v978 = vld [vmem:[%s3 + $0xc] sm:$0xf]
    %v983 = vunpack.c.l.b16 %v975
    %v984 = vunpack.c.l.b16 %v976
    %v985 = vunpack.c.l.b16 %v977
    %v986 = vunpack.c.l.b16 %v978
    %v987 = vpack.c.b16 %v984, %v983
    %v988 = vpack.c.b16 %v986, %v985
    %991 = vmatprep.subr.bf16.mxu0 0
    %992 = vmatpush1.bf16.msra.mxu0 %v987
    %993 = vmatprep.subr.bf16.mxu0 0
    %994 = vmatpush1.bf16.msra.mxu0 %v988
    %995 = vmatprep.subr.bf16.mxu0 0
    %996 = vmatpush1.bf16.msra.mxu0 0
    %997 = vmatprep.subr.bf16.mxu0 0
    %998 = vmatpush1.bf16.msra.mxu0 0
    %999 = vmatprep.subr.bf16.mxu0 0
    %1000 = vmatpush1.bf16.msra.mxu0 0
    %1001 = vmatprep.subr.bf16.mxu0 0
    %1002 = vmatpush1.bf16.msra.mxu0 0
    %1003 = vmatprep.subr.bf16.mxu0 0
    %1004 = vmatpush1.bf16.msra.mxu0 0
    %1005 = vmatprep.subr.bf16.mxu0 0
    %1006 = vmatpush1.bf16.msra.mxu0 0
    %1007 = vmatprep.subr.bf16.mxu0 0
    %1008 = vmatpush1.bf16.msra.mxu0 0
    %1009 = vmatprep.subr.bf16.mxu0 0
    %1010 = vmatpush1.bf16.msra.mxu0 0
    %1011 = vmatprep.subr.bf16.mxu0 0
    %1012 = vmatpush1.bf16.msra.mxu0 0
    %1013 = vmatprep.subr.bf16.mxu0 0
    %1014 = vmatpush1.bf16.msra.mxu0 0
    %1015 = vmatprep.subr.bf16.mxu0 0
    %1016 = vmatpush1.bf16.msra.mxu0 0
    %1017 = vmatprep.subr.bf16.mxu0 0
    %1018 = vmatpush1.bf16.msra.mxu0 0
    %1019 = vmatprep.subr.bf16.mxu0 0
    %1020 = vmatpush1.bf16.msra.mxu0 0
    %1021 = vmatprep.subr.bf16.mxu0 0
    %1022 = vmatpush1.bf16.msra.mxu0 0
    %1023 = vmatprep.mubr.bf16.mxu0 0
    %1024 = vmatmul.mubr.bf16.gmra.mrb[0].mxu0 %v837
    %v1025 = vpop.f32.mrb[0].mxu0
    %v1026 = vadd.f32 0.0, %v1025
    %v1027 = vpop.f32.mrb[0].mxu0
    %v1028 = vpop.f32.mrb[0].mxu0
    %v1029 = vpop.f32.mrb[0].mxu0
    %1030 = vdwg.mxu0
    %v1031 = vadd.f32 %v180, %v1026
    %v1032 = vxor.u32 %v1031, 2147483648
    %v1033 = vmul.f32 %v1032, 1.442695
    %v1034 = vpow.pop %v1033
    %v1035 = vadd.f32 %v1034, 1.0
    %v1036 = vrcp.pop %v1035
    %v1037 = vmul.f32 1.0, %v1036
    %v1038 = vmul.f32 %v1037, 2.0
    %v1039 = vsub.f32 %v1038, 1.0
    %v1040 = vsel %vm251, %v1039, %v1037
    %v1041 = vmul.f32 %v1040, %v809
    %1043 = vrot.lane.b32.xlu0 %v1040, 64
    %v1044 = vpop.permute.xlu0 %1043
    %v1046 = vmul.f32 %v1040, %v1044
    %1048 = vrot.lane.b32.xlu0 %v1046, 32
    %v1049 = vpop.permute.xlu0 %1048
    %v1051 = vadd.f32 %v1041, %v1049
    %v1052 = vtanh.pop %v1051
    %1054 = vrot.lane.b32.xlu0 %v1052, 64
    %v1055 = vpop.permute.xlu0 %1054
    %v1057 = vmul.f32 %v1040, %v1055
    %v1058 = vpack.c.bf16 %v1057, %v1057
    %v1059 = vld [vmem:[%s6] sm:$0xf]
    %v1060 = vld [vmem:[%s6 + $0x4] sm:$0xf]
    %v1061 = vld [vmem:[%s6 + $0x8] sm:$0xf]
    %v1062 = vld [vmem:[%s6 + $0xc] sm:$0xf]
    %1064 = vrot.lane.b32.xlu0 %v1058, 32
    %v1065 = vpop.permute.xlu0 %1064
    %v1070 = vunpack.c.l.b16 %v1059
    %v1071 = vunpack.c.l.b16 %v1060
    %v1072 = vunpack.c.l.b16 %v1061
    %v1073 = vunpack.c.l.b16 %v1062
    %v1074 = vpack.c.b16 %v1071, %v1070
    %v1075 = vpack.c.b16 %v1073, %v1072
    %v1079 = vsel %vm268, %v1065, 0
    %1081 = vmatprep.subr.bf16.mxu0 0
    %1082 = vmatpush1.bf16.msra.mxu0 %v1074
    %1083 = vmatprep.subr.bf16.mxu0 0
    %1084 = vmatpush1.bf16.msra.mxu0 %v1075
    %1085 = vmatprep.subr.bf16.mxu0 0
    %1086 = vmatpush1.bf16.msra.mxu0 0
    %1087 = vmatprep.subr.bf16.mxu0 0
    %1088 = vmatpush1.bf16.msra.mxu0 0
    %1089 = vmatprep.subr.bf16.mxu0 0
    %1090 = vmatpush1.bf16.msra.mxu0 0
    %1091 = vmatprep.subr.bf16.mxu0 0
    %1092 = vmatpush1.bf16.msra.mxu0 0
    %1093 = vmatprep.subr.bf16.mxu0 0
    %1094 = vmatpush1.bf16.msra.mxu0 0
    %1095 = vmatprep.subr.bf16.mxu0 0
    %1096 = vmatpush1.bf16.msra.mxu0 0
    %1097 = vmatprep.subr.bf16.mxu0 0
    %1098 = vmatpush1.bf16.msra.mxu0 0
    %1099 = vmatprep.subr.bf16.mxu0 0
    %1100 = vmatpush1.bf16.msra.mxu0 0
    %1101 = vmatprep.subr.bf16.mxu0 0
    %1102 = vmatpush1.bf16.msra.mxu0 0
    %1103 = vmatprep.subr.bf16.mxu0 0
    %1104 = vmatpush1.bf16.msra.mxu0 0
    %1105 = vmatprep.subr.bf16.mxu0 0
    %1106 = vmatpush1.bf16.msra.mxu0 0
    %1107 = vmatprep.subr.bf16.mxu0 0
    %1108 = vmatpush1.bf16.msra.mxu0 0
    %1109 = vmatprep.subr.bf16.mxu0 0
    %1110 = vmatpush1.bf16.msra.mxu0 0
    %1111 = vmatprep.subr.bf16.mxu0 0
    %1112 = vmatpush1.bf16.msra.mxu0 0
    %1113 = vmatprep.mubr.bf16.mxu0 0
    %1114 = vmatmul.mubr.bf16.gmra.mrb[0].mxu0 %v1079
    %v1115 = vpop.f32.mrb[0].mxu0
    %v1116 = vadd.f32 0.0, %v1115
    %v1117 = vpop.f32.mrb[0].mxu0
    %v1118 = vpop.f32.mrb[0].mxu0
    %v1119 = vpop.f32.mrb[0].mxu0
    %1120 = vdwg.mxu0
    %v1121 = vadd.f32 %v242, %v1116
    %v1122 = vpack.c.bf16 %v969, %v969
    %v1123 = vld [vmem:[%s7] sm:$0xf]
    %v1124 = vld [vmem:[%s7 + $0x4] sm:$0xf]
    %v1125 = vld [vmem:[%s7 + $0x8] sm:$0xf]
    %v1126 = vld [vmem:[%s7 + $0xc] sm:$0xf]
    %1128 = vrot.lane.b32.xlu0 %v1122, 32
    %v1129 = vpop.permute.xlu0 %1128
    %v1134 = vunpack.c.l.b16 %v1123
    %v1135 = vunpack.c.l.b16 %v1124
    %v1136 = vunpack.c.l.b16 %v1125
    %v1137 = vunpack.c.l.b16 %v1126
    %v1138 = vpack.c.b16 %v1135, %v1134
    %v1139 = vpack.c.b16 %v1137, %v1136
    %v1143 = vsel %vm268, %v1129, 0
    %1145 = vmatprep.subr.bf16.mxu0 0
    %1146 = vmatpush1.bf16.msra.mxu0 %v1138
    %1147 = vmatprep.subr.bf16.mxu0 0
    %1148 = vmatpush1.bf16.msra.mxu0 %v1139
    %1149 = vmatprep.subr.bf16.mxu0 0
    %1150 = vmatpush1.bf16.msra.mxu0 0
    %1151 = vmatprep.subr.bf16.mxu0 0
    %1152 = vmatpush1.bf16.msra.mxu0 0
    %1153 = vmatprep.subr.bf16.mxu0 0
    %1154 = vmatpush1.bf16.msra.mxu0 0
    %1155 = vmatprep.subr.bf16.mxu0 0
    %1156 = vmatpush1.bf16.msra.mxu0 0
    %1157 = vmatprep.subr.bf16.mxu0 0
    %1158 = vmatpush1.bf16.msra.mxu0 0
    %1159 = vmatprep.subr.bf16.mxu0 0
    %1160 = vmatpush1.bf16.msra.mxu0 0
    %1161 = vmatprep.subr.bf16.mxu0 0
    %1162 = vmatpush1.bf16.msra.mxu0 0
    %1163 = vmatprep.subr.bf16.mxu0 0
    %1164 = vmatpush1.bf16.msra.mxu0 0
    %1165 = vmatprep.subr.bf16.mxu0 0
    %1166 = vmatpush1.bf16.msra.mxu0 0
    %1167 = vmatprep.subr.bf16.mxu0 0
    %1168 = vmatpush1.bf16.msra.mxu0 0
    %1169 = vmatprep.subr.bf16.mxu0 0
    %1170 = vmatpush1.bf16.msra.mxu0 0
    %1171 = vmatprep.subr.bf16.mxu0 0
    %1172 = vmatpush1.bf16.msra.mxu0 0
    %1173 = vmatprep.subr.bf16.mxu0 0
    %1174 = vmatpush1.bf16.msra.mxu0 0
    %1175 = vmatprep.subr.bf16.mxu0 0
    %1176 = vmatpush1.bf16.msra.mxu0 0
    %1177 = vmatprep.mubr.bf16.mxu0 0
    %1178 = vmatmul.mubr.bf16.gmra.mrb[0].mxu0 %v1143
    %v1179 = vpop.f32.mrb[0].mxu0
    %v1180 = vadd.f32 0.0, %v1179
    %v1181 = vpop.f32.mrb[0].mxu0
    %v1182 = vpop.f32.mrb[0].mxu0
    %v1183 = vpop.f32.mrb[0].mxu0
    %1184 = vdwg.mxu0
    %v1185 = vadd.f32 %v1121, %v1180
    %v1186 = vxor.u32 %v1185, 2147483648
    %v1187 = vmul.f32 %v1186, 1.442695
    %v1188 = vpow.pop %v1187
    %v1189 = vadd.f32 %v1188, 1.0
    %v1190 = vrcp.pop %v1189
    %v1191 = vmul.f32 1.0, %v1190
    %v1192 = vmul.f32 %v1191, 2.0
    %v1193 = vsub.f32 %v1192, 1.0
    %v1194 = vsel %vm251, %v1193, %v1191
    %v1195 = vmul.f32 %v1194, %v963
    %1197 = vrot.lane.b32.xlu0 %v1194, 64
    %v1198 = vpop.permute.xlu0 %1197
    %v1200 = vmul.f32 %v1194, %v1198
    %1202 = vrot.lane.b32.xlu0 %v1200, 32
    %v1203 = vpop.permute.xlu0 %1202
    %v1205 = vadd.f32 %v1195, %v1203
    %v1206 = vtanh.pop %v1205
    %1208 = vrot.lane.b32.xlu0 %v1206, 64
    %v1209 = vpop.permute.xlu0 %1208
    %v1211 = vmul.f32 %v1194, %v1209
    %1213 = vrot.lane.b32.xlu0 %v1211, 32
    %v1214 = vpop.permute.xlu0 %1213
    %1216 = vst.msk [vmem:[#allocation2 + $0x18] sm:$0xff] %vm268, %v1214
    %v1217 = vld [vmem:[%s3] sm:$0xf]
    %v1218 = vld [vmem:[%s3 + $0x4] sm:$0xf]
    %v1219 = vld [vmem:[%s3 + $0x8] sm:$0xf]
    %v1220 = vld [vmem:[%s3 + $0xc] sm:$0xf]
    %v1225 = vunpack.c.l.b16 %v1217
    %v1226 = vunpack.c.l.b16 %v1218
    %v1227 = vunpack.c.l.b16 %v1219
    %v1228 = vunpack.c.l.b16 %v1220
    %v1229 = vpack.c.b16 %v1226, %v1225
    %v1230 = vpack.c.b16 %v1228, %v1227
    %1233 = vmatprep.subr.bf16.mxu0 0
    %1234 = vmatpush1.bf16.msra.mxu0 %v1229
    %1235 = vmatprep.subr.bf16.mxu0 0
    %1236 = vmatpush1.bf16.msra.mxu0 %v1230
    %1237 = vmatprep.subr.bf16.mxu0 0
    %1238 = vmatpush1.bf16.msra.mxu0 0
    %1239 = vmatprep.subr.bf16.mxu0 0
    %1240 = vmatpush1.bf16.msra.mxu0 0
    %1241 = vmatprep.subr.bf16.mxu0 0
    %1242 = vmatpush1.bf16.msra.mxu0 0
    %1243 = vmatprep.subr.bf16.mxu0 0
    %1244 = vmatpush1.bf16.msra.mxu0 0
    %1245 = vmatprep.subr.bf16.mxu0 0
    %1246 = vmatpush1.bf16.msra.mxu0 0
    %1247 = vmatprep.subr.bf16.mxu0 0
    %1248 = vmatpush1.bf16.msra.mxu0 0
    %1249 = vmatprep.subr.bf16.mxu0 0
    %1250 = vmatpush1.bf16.msra.mxu0 0
    %1251 = vmatprep.subr.bf16.mxu0 0
    %1252 = vmatpush1.bf16.msra.mxu0 0
    %1253 = vmatprep.subr.bf16.mxu0 0
    %1254 = vmatpush1.bf16.msra.mxu0 0
    %1255 = vmatprep.subr.bf16.mxu0 0
    %1256 = vmatpush1.bf16.msra.mxu0 0
    %1257 = vmatprep.subr.bf16.mxu0 0
    %1258 = vmatpush1.bf16.msra.mxu0 0
    %1259 = vmatprep.subr.bf16.mxu0 0
    %1260 = vmatpush1.bf16.msra.mxu0 0
    %1261 = vmatprep.subr.bf16.mxu0 0
    %1262 = vmatpush1.bf16.msra.mxu0 0
    %1263 = vmatprep.subr.bf16.mxu0 0
    %1264 = vmatpush1.bf16.msra.mxu0 0
    %1265 = vmatprep.mubr.bf16.mxu0 0
    %1266 = vmatmul.mubr.bf16.gmra.mrb[0].mxu0 %v1079
    %v1267 = vpop.f32.mrb[0].mxu0
    %v1268 = vadd.f32 0.0, %v1267
    %v1269 = vpop.f32.mrb[0].mxu0
    %v1270 = vpop.f32.mrb[0].mxu0
    %v1271 = vpop.f32.mrb[0].mxu0
    %1272 = vdwg.mxu0
    %v1273 = vadd.f32 %v185, %v1268
    %v1274 = vxor.u32 %v1273, 2147483648
    %v1275 = vmul.f32 %v1274, 1.442695
    %v1276 = vpow.pop %v1275
    %v1277 = vadd.f32 %v1276, 1.0
    %v1278 = vrcp.pop %v1277
    %v1279 = vmul.f32 1.0, %v1278
    %v1280 = vmul.f32 %v1279, 2.0
    %v1281 = vsub.f32 %v1280, 1.0
    %v1282 = vsel %vm251, %v1281, %v1279
    %v1283 = vmul.f32 %v1282, %v1051
    %1285 = vrot.lane.b32.xlu0 %v1282, 64
    %v1286 = vpop.permute.xlu0 %1285
    %v1288 = vmul.f32 %v1282, %v1286
    %1290 = vrot.lane.b32.xlu0 %v1288, 32
    %v1291 = vpop.permute.xlu0 %1290
    %v1293 = vadd.f32 %v1283, %v1291
    %v1294 = vtanh.pop %v1293
    %1296 = vrot.lane.b32.xlu0 %v1294, 64
    %v1297 = vpop.permute.xlu0 %1296
    %v1299 = vmul.f32 %v1282, %v1297
    %v1300 = vpack.c.bf16 %v1299, %v1299
    %v1301 = vld [vmem:[%s6] sm:$0xf]
    %v1302 = vld [vmem:[%s6 + $0x4] sm:$0xf]
    %v1303 = vld [vmem:[%s6 + $0x8] sm:$0xf]
    %v1304 = vld [vmem:[%s6 + $0xc] sm:$0xf]
    %1306 = vrot.lane.b32.xlu0 %v1300, 32
    %v1307 = vpop.permute.xlu0 %1306
    %v1312 = vunpack.c.l.b16 %v1301
    %v1313 = vunpack.c.l.b16 %v1302
    %v1314 = vunpack.c.l.b16 %v1303
    %v1315 = vunpack.c.l.b16 %v1304
    %v1316 = vpack.c.b16 %v1313, %v1312
    %v1317 = vpack.c.b16 %v1315, %v1314
    %v1321 = vsel %vm268, %v1307, 0
    %1323 = vmatprep.subr.bf16.mxu0 0
    %1324 = vmatpush1.bf16.msra.mxu0 %v1316
    %1325 = vmatprep.subr.bf16.mxu0 0
    %1326 = vmatpush1.bf16.msra.mxu0 %v1317
    %1327 = vmatprep.subr.bf16.mxu0 0
    %1328 = vmatpush1.bf16.msra.mxu0 0
    %1329 = vmatprep.subr.bf16.mxu0 0
    %1330 = vmatpush1.bf16.msra.mxu0 0
    %1331 = vmatprep.subr.bf16.mxu0 0
    %1332 = vmatpush1.bf16.msra.mxu0 0
    %1333 = vmatprep.subr.bf16.mxu0 0
    %1334 = vmatpush1.bf16.msra.mxu0 0
    %1335 = vmatprep.subr.bf16.mxu0 0
    %1336 = vmatpush1.bf16.msra.mxu0 0
    %1337 = vmatprep.subr.bf16.mxu0 0
    %1338 = vmatpush1.bf16.msra.mxu0 0
    %1339 = vmatprep.subr.bf16.mxu0 0
    %1340 = vmatpush1.bf16.msra.mxu0 0
    %1341 = vmatprep.subr.bf16.mxu0 0
    %1342 = vmatpush1.bf16.msra.mxu0 0
    %1343 = vmatprep.subr.bf16.mxu0 0
    %1344 = vmatpush1.bf16.msra.mxu0 0
    %1345 = vmatprep.subr.bf16.mxu0 0
    %1346 = vmatpush1.bf16.msra.mxu0 0
    %1347 = vmatprep.subr.bf16.mxu0 0
    %1348 = vmatpush1.bf16.msra.mxu0 0
    %1349 = vmatprep.subr.bf16.mxu0 0
    %1350 = vmatpush1.bf16.msra.mxu0 0
    %1351 = vmatprep.subr.bf16.mxu0 0
    %1352 = vmatpush1.bf16.msra.mxu0 0
    %1353 = vmatprep.subr.bf16.mxu0 0
    %1354 = vmatpush1.bf16.msra.mxu0 0
    %1355 = vmatprep.mubr.bf16.mxu0 0
    %1356 = vmatmul.mubr.bf16.gmra.mrb[0].mxu0 %v1321
    %v1357 = vpop.f32.mrb[0].mxu0
    %v1358 = vadd.f32 0.0, %v1357
    %v1359 = vpop.f32.mrb[0].mxu0
    %v1360 = vpop.f32.mrb[0].mxu0
    %v1361 = vpop.f32.mrb[0].mxu0
    %1362 = vdwg.mxu0
    %v1363 = vadd.f32 %v242, %v1358
    %v1364 = vpack.c.bf16 %v1211, %v1211
    %v1365 = vld [vmem:[%s7] sm:$0xf]
    %v1366 = vld [vmem:[%s7 + $0x4] sm:$0xf]
    %v1367 = vld [vmem:[%s7 + $0x8] sm:$0xf]
    %v1368 = vld [vmem:[%s7 + $0xc] sm:$0xf]
    %1370 = vrot.lane.b32.xlu0 %v1364, 32
    %v1371 = vpop.permute.xlu0 %1370
    %v1376 = vunpack.c.l.b16 %v1365
    %v1377 = vunpack.c.l.b16 %v1366
    %v1378 = vunpack.c.l.b16 %v1367
    %v1379 = vunpack.c.l.b16 %v1368
    %v1380 = vpack.c.b16 %v1377, %v1376
    %v1381 = vpack.c.b16 %v1379, %v1378
    %v1385 = vsel %vm268, %v1371, 0
    %1387 = vmatprep.subr.bf16.mxu0 0
    %1388 = vmatpush1.bf16.msra.mxu0 %v1380
    %1389 = vmatprep.subr.bf16.mxu0 0
    %1390 = vmatpush1.bf16.msra.mxu0 %v1381
    %1391 = vmatprep.subr.bf16.mxu0 0
    %1392 = vmatpush1.bf16.msra.mxu0 0
    %1393 = vmatprep.subr.bf16.mxu0 0
    %1394 = vmatpush1.bf16.msra.mxu0 0
    %1395 = vmatprep.subr.bf16.mxu0 0
    %1396 = vmatpush1.bf16.msra.mxu0 0
    %1397 = vmatprep.subr.bf16.mxu0 0
    %1398 = vmatpush1.bf16.msra.mxu0 0
    %1399 = vmatprep.subr.bf16.mxu0 0
    %1400 = vmatpush1.bf16.msra.mxu0 0
    %1401 = vmatprep.subr.bf16.mxu0 0
    %1402 = vmatpush1.bf16.msra.mxu0 0
    %1403 = vmatprep.subr.bf16.mxu0 0
    %1404 = vmatpush1.bf16.msra.mxu0 0
    %1405 = vmatprep.subr.bf16.mxu0 0
    %1406 = vmatpush1.bf16.msra.mxu0 0
    %1407 = vmatprep.subr.bf16.mxu0 0
    %1408 = vmatpush1.bf16.msra.mxu0 0
    %1409 = vmatprep.subr.bf16.mxu0 0
    %1410 = vmatpush1.bf16.msra.mxu0 0
    %1411 = vmatprep.subr.bf16.mxu0 0
    %1412 = vmatpush1.bf16.msra.mxu0 0
    %1413 = vmatprep.subr.bf16.mxu0 0
    %1414 = vmatpush1.bf16.msra.mxu0 0
    %1415 = vmatprep.subr.bf16.mxu0 0
    %1416 = vmatpush1.bf16.msra.mxu0 0
    %1417 = vmatprep.subr.bf16.mxu0 0
    %1418 = vmatpush1.bf16.msra.mxu0 0
    %1419 = vmatprep.mubr.bf16.mxu0 0
    %1420 = vmatmul.mubr.bf16.gmra.mrb[0].mxu0 %v1385
    %v1421 = vpop.f32.mrb[0].mxu0
    %v1422 = vadd.f32 0.0, %v1421
    %v1423 = vpop.f32.mrb[0].mxu0
    %v1424 = vpop.f32.mrb[0].mxu0
    %v1425 = vpop.f32.mrb[0].mxu0
    %1426 = vdwg.mxu0
    %v1427 = vadd.f32 %v1363, %v1422
    %v1428 = vxor.u32 %v1427, 2147483648
    %v1429 = vmul.f32 %v1428, 1.442695
    %v1430 = vpow.pop %v1429
    %v1431 = vadd.f32 %v1430, 1.0
    %v1432 = vrcp.pop %v1431
    %v1433 = vmul.f32 1.0, %v1432
    %v1434 = vmul.f32 %v1433, 2.0
    %v1435 = vsub.f32 %v1434, 1.0
    %v1436 = vsel %vm251, %v1435, %v1433
    %v1437 = vmul.f32 %v1436, %v1205
    %1439 = vrot.lane.b32.xlu0 %v1436, 64
    %v1440 = vpop.permute.xlu0 %1439
    %v1442 = vmul.f32 %v1436, %v1440
    %1444 = vrot.lane.b32.xlu0 %v1442, 32
    %v1445 = vpop.permute.xlu0 %1444
    %v1447 = vadd.f32 %v1437, %v1445
    %v1448 = vtanh.pop %v1447
    %1450 = vrot.lane.b32.xlu0 %v1448, 64
    %v1451 = vpop.permute.xlu0 %1450
    %v1453 = vmul.f32 %v1436, %v1451
    %1455 = vrot.lane.b32.xlu0 %v1453, 32
    %v1456 = vpop.permute.xlu0 %1455
    %1458 = vst.msk [vmem:[#allocation2 + $0x20] sm:$0xff] %vm268, %v1456
    %v1459 = vld [vmem:[#allocation2] sm:$0xff]
    %v1460 = vld [vmem:[#allocation2 + $0x8] sm:$0xff]
    %v1461 = vld [vmem:[#allocation2 + $0x10] sm:$0xff]
    %v1462 = vld [vmem:[#allocation2 + $0x18] sm:$0xff]
    %v1463 = vld [vmem:[#allocation2 + $0x20] sm:$0xff]
    %v1464 = vpack.c.bf16 %v1460, %v1459
    %v1465 = vpack.c.bf16 %v1462, %v1461
    %v1466 = vpack.c.bf16 %v1463, %v1463
    %v1467 = vld [vmem:[#allocation9] sm:$0xf]
    %v1468 = vld [vmem:[#allocation9 + $0x4] sm:$0xf]
    %v1469 = vld [vmem:[#allocation9 + $0x8] sm:$0xf]
    %v1470 = vld [vmem:[#allocation9 + $0xc] sm:$0xf]
    %v1471 = vld [vmem:[%s10] sm:$0x1]
    %v1473 = vlaneseq
    %v1474 = vshrl.u32 %v1473, 7
    %v1475 = vsub.s32 0, %v1474
    %v1476 = vrot.slane %v1471, %v1475
    %v1482 = vunpack.c.l.b16 %v1467
    %v1483 = vunpack.c.l.b16 %v1468
    %v1484 = vunpack.c.l.b16 %v1469
    %v1485 = vunpack.c.l.b16 %v1470
    %v1486 = vpack.c.b16 %v1483, %v1482
    %v1487 = vpack.c.b16 %v1485, %v1484
    %v1491 = vsel %vm268, %v1464, 0
    %v1494 = vsel %vm268, %v1465, 0
    %v1497 = vsel %vm268, %v1466, 0
    %1499 = vmatprep.subr.bf16.mxu0 0
    %1500 = vmatpush1.bf16.msra.mxu0 %v1486
    %1501 = vmatprep.subr.bf16.mxu0 0
    %1502 = vmatpush1.bf16.msra.mxu0 %v1487
    %1503 = vmatprep.subr.bf16.mxu0 0
    %1504 = vmatpush1.bf16.msra.mxu0 0
    %1505 = vmatprep.subr.bf16.mxu0 0
    %1506 = vmatpush1.bf16.msra.mxu0 0
    %1507 = vmatprep.subr.bf16.mxu0 0
    %1508 = vmatpush1.bf16.msra.mxu0 0
    %1509 = vmatprep.subr.bf16.mxu0 0
    %1510 = vmatpush1.bf16.msra.mxu0 0
    %1511 = vmatprep.subr.bf16.mxu0 0
    %1512 = vmatpush1.bf16.msra.mxu0 0
    %1513 = vmatprep.subr.bf16.mxu0 0
    %1514 = vmatpush1.bf16.msra.mxu0 0
    %1515 = vmatprep.subr.bf16.mxu0 0
    %1516 = vmatpush1.bf16.msra.mxu0 0
    %1517 = vmatprep.subr.bf16.mxu0 0
    %1518 = vmatpush1.bf16.msra.mxu0 0
    %1519 = vmatprep.subr.bf16.mxu0 0
    %1520 = vmatpush1.bf16.msra.mxu0 0
    %1521 = vmatprep.subr.bf16.mxu0 0
    %1522 = vmatpush1.bf16.msra.mxu0 0
    %1523 = vmatprep.subr.bf16.mxu0 0
    %1524 = vmatpush1.bf16.msra.mxu0 0
    %1525 = vmatprep.subr.bf16.mxu0 0
    %1526 = vmatpush1.bf16.msra.mxu0 0
    %1527 = vmatprep.subr.bf16.mxu0 0
    %1528 = vmatpush1.bf16.msra.mxu0 0
    %1529 = vmatprep.subr.bf16.mxu0 0
    %1530 = vmatpush1.bf16.msra.mxu0 0
    %1531 = vmatprep.mubr.bf16.mxu0 0
    %1532 = vmatmul.mubr.bf16.gmra.mrb[0].mxu0 %v1491
    %v1533 = vpop.f32.mrb[0].mxu0
    %v1534 = vadd.f32 %v1476, %v1533
    %v1535 = vpop.f32.mrb[0].mxu0
    %v1536 = vpop.f32.mrb[0].mxu0
    %v1537 = vadd.f32 %v1476, %v1536
    %v1538 = vpop.f32.mrb[0].mxu0
    %1539 = vmatprep.mubr.bf16.mxu0 0
    %1540 = vmatmul.mubr.bf16.gmra.mrb[0].mxu0 %v1494
    %v1541 = vpop.f32.mrb[0].mxu0
    %v1542 = vadd.f32 %v1476, %v1541
    %v1543 = vpop.f32.mrb[0].mxu0
    %v1544 = vpop.f32.mrb[0].mxu0
    %v1545 = vadd.f32 %v1476, %v1544
    %v1546 = vpop.f32.mrb[0].mxu0
    %1547 = vmatprep.mubr.bf16.mxu0 0
    %1548 = vmatmul.mubr.bf16.gmra.mrb[0].mxu0 %v1497
    %v1549 = vpop.f32.mrb[0].mxu0
    %v1550 = vadd.f32 %v1476, %v1549
    %v1551 = vpop.f32.mrb[0].mxu0
    %v1552 = vpop.f32.mrb[0].mxu0
    %v1553 = vpop.f32.mrb[0].mxu0
    %1554 = vdwg.mxu0
    %1555 = vmax.xlane.f32.xlu0 %v1534
    %v1556 = vpop.xlane.xlu0 %1555
    %1557 = vmax.xlane.f32.xlu0 %v1537
    %v1558 = vpop.xlane.xlu0 %1557
    %1559 = vmax.xlane.f32.xlu0 %v1542
    %v1560 = vpop.xlane.xlu0 %1559
    %1561 = vmax.xlane.f32.xlu0 %v1545
    %v1562 = vpop.xlane.xlu0 %1561
    %1563 = vmax.xlane.f32.xlu0 %v1550
    %v1564 = vpop.xlane.xlu0 %1563
    %v1565 = vsub.f32 %v1534, %v1556
    %v1566 = vsub.f32 %v1537, %v1558
    %v1567 = vsub.f32 %v1542, %v1560
    %v1568 = vsub.f32 %v1545, %v1562
    %v1569 = vsub.f32 %v1550, %v1564
    %v1570 = vmul.f32 %v1565, 1.442695
    %v1571 = vpow.pop %v1570
    %v1572 = vmul.f32 %v1566, 1.442695
    %v1573 = vpow.pop %v1572
    %v1574 = vmul.f32 %v1567, 1.442695
    %v1575 = vpow.pop %v1574
    %v1576 = vmul.f32 %v1568, 1.442695
    %v1577 = vpow.pop %v1576
    %v1578 = vmul.f32 %v1569, 1.442695
    %v1579 = vpow.pop %v1578
    %1580 = vadd.xlane.f32.xlu0 %v1571
    %v1581 = vpop.xlane.xlu0 %1580
    %1582 = vadd.xlane.f32.xlu0 %v1573
    %v1583 = vpop.xlane.xlu0 %1582
    %1584 = vadd.xlane.f32.xlu0 %v1575
    %v1585 = vpop.xlane.xlu0 %1584
    %1586 = vadd.xlane.f32.xlu0 %v1577
    %v1587 = vpop.xlane.xlu0 %1586
    %1588 = vadd.xlane.f32.xlu0 %v1579
    %v1589 = vpop.xlane.xlu0 %1588
    %v1590 = vlog2.pop %v1581
    %v1591 = vmul.f32 %v1590, 0.6931472
    %v1592 = vlog2.pop %v1583
    %v1593 = vmul.f32 %v1592, 0.6931472
    %v1594 = vlog2.pop %v1585
    %v1595 = vmul.f32 %v1594, 0.6931472
    %v1596 = vlog2.pop %v1587
    %v1597 = vmul.f32 %v1596, 0.6931472
    %v1598 = vlog2.pop %v1589
    %v1599 = vmul.f32 %v1598, 0.6931472
    %v1600 = vsub.f32 %v1565, %v1591
    %v1601 = vsub.f32 %v1566, %v1593
    %v1602 = vsub.f32 %v1567, %v1595
    %v1603 = vsub.f32 %v1568, %v1597
    %v1604 = vsub.f32 %v1569, %v1599
    %1605 = vst [vmem:[#allocation11] sm:$0xff] %v1600
    %1606 = vst [vmem:[#allocation11 + $0x8] sm:$0xff] %v1601
    %1607 = vst [vmem:[#allocation11 + $0x10] sm:$0xff] %v1602
    %1608 = vst [vmem:[#allocation11 + $0x18] sm:$0xff] %v1603
    %1609 = vst [vmem:[#allocation11 + $0x20] sm:$0xff] %v1604
    // Predicated region
    $region62: #{tpu_custom_call.1} parent=1 // pred_check
      _
    $region63: #{tpu_custom_call.1} parent=1 // pred_check_branch
      %1611 = sbr.rel (0) target = $region65
    $region64: #{tpu_custom_call.1} parent=1 // pred_region
      %s1613 = ssub.s32 640, 640
      %1614 = vsyncadd [#allocation5], %s1613
      %s1615 = sshll.u32 [#allocation11], 4
      %s1616 = int_to_ptr.vmem [resolvable:$true] %s1615
      %1621 = dma.vmem_to_hbm [thread:$0]  %s1616, 640, %s11, [#allocation5], 128, 128, 8
    $region65: #{tpu_custom_call.1} parent=1 // pred_fallthru
      _
    // Predicated region
    $region66: #{tpu_custom_call.1} parent=1 // pred_check
      _
    $region67: #{tpu_custom_call.1} parent=1 // pred_check_branch
      %1623 = sbr.rel (0) target = $region69
    $region68: #{tpu_custom_call.1} parent=1 // pred_region
      %1624 = dma.done [#allocation5], 640
    $region69: #{tpu_custom_call.1} parent=1 // pred_fallthru
      _
    %1625 = vsyncpa [#allocation4], 1
    %1626 = vsyncpa [#allocation7], 1
    %1627 = vsyncpa [#allocation10], 1
    %1628 = vsyncpa [#allocation5], 1

</llo_original>
